<compile_context>
chip_gen: v7x
topology: tpu7x:2x2x1
jax: 0.10.0
libtpu: 0.0.40
codegen_flags: <defaults>
</compile_context>

<pallas_src>
import functools

import jax
import jax.numpy as jnp
from jax import lax
from jax.experimental import pallas as pl
from jax.experimental.pallas import tpu as pltpu


def _round_up(x, m):
    return (x + m - 1) // m * m


def gru_encoder_kernel(gi_ref, h0_ref, wh_ref, wi_ref, bh_ref, bi_ref,
                       out_ref, h_scr, *, seq_len, n_layers, hp, unroll):
    """Encode a (Bt)-sequence tile: one grid step per batch tile.

    gi_ref : VMEM (TP, Bt, 3HP) f32 -- hoisted layer-0 input gates [r|z|n]
    h0_ref : VMEM (Bt, HP)      f32 -- initial hidden states for this tile
    wh_ref : VMEM (HP, 3HP)    bf16 -- [W_hr^T | W_hz^T | W_hn^T] (lane blocks)
    wi_ref : VMEM (HP, 3HP)    bf16 -- [W_ir^T | W_iz^T | W_in^T] (layers >= 1)
    bh_ref : VMEM (1, 3HP)      f32 -- [b_hr | b_hz | b_hn]
    bi_ref : VMEM (1, 3HP)      f32 -- [b_ir | b_iz | b_in]   (layers >= 1)
    out_ref: VMEM (TP, Bt, HP)  f32 -- per-step GRU outputs (time-major)
    h_scr  : VMEM (Bt, HP)      f32 -- hidden-state carry across time steps
    """
    tp, bt, _ = out_ref.shape

    # Zero only the padded tail time-rows; valid rows are overwritten below.
    if seq_len < tp:
        out_ref[pl.ds(seq_len, tp - seq_len), :, :] = jnp.zeros(
            (tp - seq_len, bt, hp), out_ref.dtype)

    h_scr[...] = h0_ref[...]

    def step(t, carry):
        # Layer-0 input-side gates were precomputed in the wrapper; only the
        # recurrent h @ W_h* matmul remains on the serial per-step chain.
        gi = gi_ref[pl.ds(t, 1), :, :].reshape(bt, 3 * hp)      # (Bt, 3HP) f32
        h = h_scr[...]                                          # (Bt, HP)  f32
        # EncoderRNN.forward applies the SAME 1-layer GRU `n_layers` times
        # (matching the PyTorch tutorial module, NOT a true multi-layer GRU).
        for layer in range(n_layers):
            h16 = h.astype(jnp.bfloat16)
            if layer > 0:
                gi = (jnp.dot(h16, wi_ref[...],
                              preferred_element_type=jnp.float32)
                      + bi_ref[...])
            gh = (jnp.dot(h16, wh_ref[...],
                          preferred_element_type=jnp.float32)
                  + bh_ref[...])                                # (Bt, 3HP)
            rz = jax.nn.sigmoid(gi[:, 0:2 * hp] + gh[:, 0:2 * hp])
            r = rz[:, 0:hp]                                     # lane-aligned
            z = rz[:, hp:2 * hp]
            n = jnp.tanh(gi[:, 2 * hp:3 * hp] + r * gh[:, 2 * hp:3 * hp])
            h = (1.0 - z) * n + z * h
        h_scr[...] = h
        # Dense (Bt, HP) store -- sublane/lane aligned, no masked vst.
        out_ref[pl.ds(t, 1), :, :] = h.reshape(1, bt, hp).astype(out_ref.dtype)
        return carry

    lax.fori_loop(0, seq_len, step, 0, unroll=unroll)


def encoder_rnn_encode(tokens, hidden0, params, *, n_layers=1):
    """Run the EncoderRNN over whole sequences in a single pallas_call.

    tokens : (B, T) int32 token ids
    hidden0: (B, H) float32 initial hidden state per sequence
    returns: outputs (B, T, H) float32, final hidden (B, H) float32
    """
    tokens = jnp.asarray(tokens, jnp.int32)
    emb, w_ih, w_hh, b_ih, b_hh = [jnp.asarray(p, jnp.float32) for p in params]
    B, T = tokens.shape
    V, H = emb.shape

    HP = _round_up(H, 128)          # lane-aligned hidden size
    TP = _round_up(T, 8)            # time padding (leading axis, cheap)
    if B <= 128:
        BT = _round_up(B, 8)        # batch tile = matmul M dim (sublanes)
        BP = BT
    else:
        BT = 128
        BP = _round_up(B, BT)

    # ---- Hoisted work, done once in the wrapper as plain XLA ----------------
    # Embedding gather + layer-0 input projections for the whole batch/seq in
    # one matmul. The embedding table never enters kernel VMEM (v7x-safe).
    x_seq = emb[tokens]                                       # (B, T, H)
    gi_seq = jnp.einsum('bth,gh->btg', x_seq, w_ih) + b_ih    # (B, T, 3H) [r|z|n]
    gi_t = jnp.transpose(gi_seq, (1, 0, 2))                   # time-major (T, B, 3H)

    gi_p = jnp.zeros((TP, BP, 3 * HP), jnp.float32)
    for g in range(3):
        gi_p = gi_p.at[:T, :B, g * HP:g * HP + H].set(
            gi_t[..., g * H:(g + 1) * H])

    def pack_w(w):
        # (3H, H) torch gate weights -> (HP, 3HP) bf16 so x @ pack == x @ W_g^T
        out = jnp.zeros((HP, 3 * HP), jnp.float32)
        for g in range(3):
            out = out.at[:H, g * HP:g * HP + H].set(w[g * H:(g + 1) * H].T)
        return out.astype(jnp.bfloat16)      # bf16 weights, f32 accumulation

    def pack_b(b):
        out = jnp.zeros((1, 3 * HP), jnp.float32)
        for g in range(3):
            out = out.at[0, g * HP:g * HP + H].set(b[g * H:(g + 1) * H])
        return out

    wh = pack_w(w_hh)
    wi = pack_w(w_ih)        # only used in-kernel when n_layers > 1
    bh = pack_b(b_hh)
    bi = pack_b(b_ih)

    h0_p = jnp.zeros((BP, HP), jnp.float32).at[:B, :H].set(
        jnp.asarray(hidden0, jnp.float32))

    unroll = T if T <= 16 else 4     # partial unroll for long sequences

    kernel = functools.partial(gru_encoder_kernel, seq_len=T,
                               n_layers=n_layers, hp=HP, unroll=unroll)

    blk_bytes = (TP * BT * 3 * HP * 4        # gi block (f32)
                 + BT * HP * 4               # h0 block
                 + 2 * HP * 3 * HP * 2       # wh + wi blocks (bf16)
                 + 2 * 3 * HP * 4            # bh + bi blocks (f32)
                 + TP * BT * HP * 4)         # out block (f32)
    # Default pipelining double-buffers each block; the 64 MiB cap keeps the
    # same setting v7x-safe (v5e/v6e could raise toward ~100 MiB if needed).
    vmem_limit = int(min(max(2 * blk_bytes + BT * HP * 4 + (2 << 20), 16 << 20),
                         64 << 20))

    # TODO(synk): at production sizes, set pipeline_mode=pl.Buffered(1) on the
    # constant-index weight/bias BlockSpecs to avoid pointless double-buffering.
    out = pl.pallas_call(
        kernel,
        out_shape=jax.ShapeDtypeStruct((TP, BP, HP), jnp.float32),
        grid_spec=pltpu.PrefetchScalarGridSpec(
            num_scalar_prefetch=0,
            grid=(BP // BT,),
            in_specs=[
                pl.BlockSpec((TP, BT, 3 * HP), lambda i: (0, i, 0)),   # gi
                pl.BlockSpec((BT, HP), lambda i: (i, 0)),              # h0
                pl.BlockSpec((HP, 3 * HP), lambda i: (0, 0)),          # W_h bf16
                pl.BlockSpec((HP, 3 * HP), lambda i: (0, 0)),          # W_i bf16
                pl.BlockSpec((1, 3 * HP), lambda i: (0, 0)),           # b_h
                pl.BlockSpec((1, 3 * HP), lambda i: (0, 0)),           # b_i
            ],
            out_specs=pl.BlockSpec((TP, BT, HP), lambda i: (0, i, 0)),
            scratch_shapes=[pltpu.VMEM((BT, HP), jnp.float32)],
        ),
        compiler_params=pltpu.CompilerParams(
            dimension_semantics=("parallel",),     # batch tiles -> megacore
            vmem_limit_bytes=vmem_limit),
    )(gi_p, h0_p, wh, wi, bh, bi)

    outputs = jnp.transpose(out[:T, :B, :H], (1, 0, 2))      # (B, T, H)
    final_hidden = outputs[:, T - 1, :]
    return outputs, final_hidden


def encoder_rnn_forward(token, hidden, params, *, n_layers=1):
    """Single-step interface matching EncoderRNN.forward.

    token: (1,) int32 ; hidden: (1,1,H) -> (output (1,1,H), hidden (1,1,H))
    """
    H = params[0].shape[1]
    outs, h_fin = encoder_rnn_encode(token.reshape(1, 1),
                                     hidden.reshape(1, H),
                                     params, n_layers=n_layers)
    return outs.reshape(1, 1, H), h_fin.reshape(1, 1, H)


def encoder_rnn_reference(tokens, hidden0, params, *, n_layers=1):
    """Pure-JAX f32 reference: the PyTorch forward applied once per token."""
    emb, w_ih, w_hh, b_ih, b_hh = [jnp.asarray(p, jnp.float32) for p in params]
    H = emb.shape[1]
    B, T = tokens.shape
    all_out, all_h = [], []
    for b in range(B):
        h = hidden0[b].reshape(1, H).astype(jnp.float32)
        rows = []
        for t in range(T):
            x = emb[tokens[b, t]].reshape(1, H)
            for _ in range(n_layers):
                gi = x @ w_ih.T + b_ih
                gh = h @ w_hh.T + b_hh
                r = jax.nn.sigmoid(gi[:, :H] + gh[:, :H])
                z = jax.nn.sigmoid(gi[:, H:2 * H] + gh[:, H:2 * H])
                n = jnp.tanh(gi[:, 2 * H:] + r * gh[:, 2 * H:])
                h = (1.0 - z) * n + z * h
                x = h
            rows.append(x[0])
        all_out.append(jnp.stack(rows))
        all_h.append(h[0])
    return jnp.stack(all_out), jnp.stack(all_h)


if __name__ == "__main__":
    VOCAB = 16      # input_size
    HIDDEN = 32     # hidden_size
    N_LAYERS = 1
    BATCH = 2
    SEQ = 8

    key = jax.random.PRNGKey(0)
    k_emb, k_wih, k_whh, k_bih, k_bhh, k_tok = jax.random.split(key, 6)

    # Deterministic synthetic parameters (shapes match nn.Embedding / nn.GRU).
    emb = jax.random.normal(k_emb, (VOCAB, HIDDEN), jnp.float32) * 0.1
    w_ih = jax.random.normal(k_wih, (3 * HIDDEN, HIDDEN), jnp.float32) * 0.1
    w_hh = jax.random.normal(k_whh, (3 * HIDDEN, HIDDEN), jnp.float32) * 0.1
    b_ih = jax.random.normal(k_bih, (3 * HIDDEN,), jnp.float32) * 0.1
    b_hh = jax.random.normal(k_bhh, (3 * HIDDEN,), jnp.float32) * 0.1
    params = (emb, w_ih, w_hh, b_ih, b_hh)

    tokens = jax.random.randint(k_tok, (BATCH, SEQ), 0, VOCAB, dtype=jnp.int32)
    hidden0 = jnp.zeros((BATCH, HIDDEN), jnp.float32)   # initHidden per sequence

    outs, h_fin = encoder_rnn_encode(tokens, hidden0, params, n_layers=N_LAYERS)
    outs = jax.block_until_ready(outs)
    h_fin = jax.block_until_ready(h_fin)

    outs_ref, h_ref = encoder_rnn_reference(tokens, hidden0, params,
                                            n_layers=N_LAYERS)
    assert outs.shape == (BATCH, SEQ, HIDDEN)
    assert h_fin.shape == (BATCH, HIDDEN)
    # Weights run in bf16 on the MXU (f32 accumulate) -> relaxed tolerances.
    assert jnp.allclose(outs, outs_ref, atol=2e-2, rtol=2e-2)
    assert jnp.allclose(h_fin, h_ref, atol=2e-2, rtol=2e-2)

    # n_layers > 1 path (same GRU reapplied, like the original module).
    outs2, h_fin2 = encoder_rnn_encode(tokens, hidden0, params, n_layers=2)
    outs2 = jax.block_until_ready(outs2)
    outs2_ref, h_ref2 = encoder_rnn_reference(tokens, hidden0, params,
                                              n_layers=2)
    assert jnp.allclose(outs2, outs2_ref, atol=5e-2, rtol=5e-2)
    assert jnp.allclose(h_fin2, h_ref2, atol=5e-2, rtol=5e-2)

    # Single-step interface (the original EncoderRNN.forward signature).
    out1, hid1 = encoder_rnn_forward(tokens[0, :1],
                                     jnp.zeros((1, 1, HIDDEN), jnp.float32),
                                     params, n_layers=N_LAYERS)
    out1 = jax.block_until_ready(out1)
    hid1 = jax.block_until_ready(hid1)
    assert out1.shape == (1, 1, HIDDEN) and hid1.shape == (1, 1, HIDDEN)
    assert jnp.allclose(out1, outs_ref[0, :1].reshape(1, 1, HIDDEN),
                        atol=2e-2, rtol=2e-2)

    print("KERNEL_OK")
</pallas_src>

<mosaic_0001>
module attributes {stable_mosaic.version = 11 : i64} {
  func.func @gru_encoder_kernel(%arg0: i32, %arg1: memref<8x8x384xf32, #tpu.memory_space<vmem>>, %arg2: memref<8x128xf32, #tpu.memory_space<vmem>>, %arg3: memref<128x384xbf16, #tpu.memory_space<vmem>>, %arg4: memref<128x384xbf16, #tpu.memory_space<vmem>>, %arg5: memref<1x384xf32, #tpu.memory_space<vmem>>, %arg6: memref<1x384xf32, #tpu.memory_space<vmem>>, %arg7: memref<8x8x128xf32, #tpu.memory_space<vmem>>, %arg8: memref<8x128xf32, #tpu.memory_space<vmem>>) attributes {dimension_semantics = [#tpu.dimension_semantics<parallel>], iteration_bounds = array<i64: 1>, scalar_prefetch = 0 : i64, scratch_operands = 1 : i64, tpu.core_type = #tpu.core_type<tc>, window_params = [{transform_indices = @transform_0, window_bounds = array<i64: 8, 8, 384>}, {transform_indices = @transform_1, window_bounds = array<i64: 8, 128>}, {pipeline_mode = #tpu.pipeline_mode<synchronous>, transform_indices = @transform_2, window_bounds = array<i64: 128, 384>}, {pipeline_mode = #tpu.pipeline_mode<synchronous>, transform_indices = @transform_3, window_bounds = array<i64: 128, 384>}, {pipeline_mode = #tpu.pipeline_mode<synchronous>, transform_indices = @transform_4, window_bounds = array<i64: 1, 384>}, {pipeline_mode = #tpu.pipeline_mode<synchronous>, transform_indices = @transform_5, window_bounds = array<i64: 1, 384>}, {transform_indices = @transform_6, window_bounds = array<i64: 8, 8, 128>}]} {
    %c0 = arith.constant 0 : index
    %c0_0 = arith.constant 0 : index
    %0 = vector.load %arg2[%c0, %c0_0] : memref<8x128xf32, #tpu.memory_space<vmem>>, vector<8x128xf32>
    %c0_1 = arith.constant 0 : index
    %c0_2 = arith.constant 0 : index
    %1 = vector.load %arg8[%c0_1, %c0_2] : memref<8x128xf32, #tpu.memory_space<vmem>>, vector<8x128xf32>
    tpu.vector_store %arg8[%c0_1, %c0_2], %0 {strides = array<i32>} : memref<8x128xf32, #tpu.memory_space<vmem>>, vector<8x128xf32>,
    %c0_i32 = arith.constant 0 : i32
    %2 = arith.index_cast %c0_i32 : i32 to index
    %c0_3 = arith.constant 0 : index
    %c0_4 = arith.constant 0 : index
    %3 = vector.load %arg1[%2, %c0_3, %c0_4] : memref<8x8x384xf32, #tpu.memory_space<vmem>>, vector<1x8x384xf32>
    %4 = vector.shape_cast %3 : vector<1x8x384xf32> to vector<8x384xf32>
    %c0_5 = arith.constant 0 : index
    %c0_6 = arith.constant 0 : index
    %5 = vector.load %arg8[%c0_5, %c0_6] : memref<8x128xf32, #tpu.memory_space<vmem>>, vector<8x128xf32>
    %6 = arith.truncf %5 : vector<8x128xf32> to vector<8x128xbf16>
    %c0_7 = arith.constant 0 : index
    %c0_8 = arith.constant 0 : index
    %7 = vector.load %arg3[%c0_7, %c0_8] : memref<128x384xbf16, #tpu.memory_space<vmem>>, vector<128x384xbf16>
    %cst = arith.constant dense<0.000000e+00> : vector<8x384xf32>
    %8 = tpu.matmul %6, %7, %cst {dimension_numbers = #tpu.dot_dimension_numbers<[1], [0], [0], [1], [0, 0, 1, 1], [], []>} : vector<8x128xbf16>, vector<128x384xbf16>, vector<8x384xf32> -> vector<8x384xf32>
    %c0_9 = arith.constant 0 : index
    %c0_10 = arith.constant 0 : index
    %9 = vector.load %arg5[%c0_9, %c0_10] : memref<1x384xf32, #tpu.memory_space<vmem>>, vector<1x384xf32>
    %10 = vector.broadcast %9 : vector<1x384xf32> to vector<8x384xf32>
    %11 = arith.addf %8, %10 : vector<8x384xf32>
    %12 = vector.extract_strided_slice %4 {offsets = [0, 0], sizes = [8, 256], strides = [1, 1]} : vector<8x384xf32> to vector<8x256xf32>
    %13 = vector.extract_strided_slice %11 {offsets = [0, 0], sizes = [8, 256], strides = [1, 1]} : vector<8x384xf32> to vector<8x256xf32>
    %14 = arith.addf %12, %13 : vector<8x256xf32>
    %15 = arith.negf %14 : vector<8x256xf32>
    %16 = math.exp %15 : vector<8x256xf32>
    %cst_11 = arith.constant 1.000000e+00 : f32
    %17 = vector.broadcast %cst_11 : f32 to vector<8x256xf32>
    %18 = arith.addf %17, %16 : vector<8x256xf32>
    %19 = arith.divf %17, %18 : vector<8x256xf32>
    %20 = vector.extract_strided_slice %19 {offsets = [0, 0], sizes = [8, 128], strides = [1, 1]} : vector<8x256xf32> to vector<8x128xf32>
    %21 = vector.extract_strided_slice %19 {offsets = [0, 128], sizes = [8, 128], strides = [1, 1]} : vector<8x256xf32> to vector<8x128xf32>
    %22 = vector.extract_strided_slice %4 {offsets = [0, 256], sizes = [8, 128], strides = [1, 1]} : vector<8x384xf32> to vector<8x128xf32>
    %23 = vector.extract_strided_slice %11 {offsets = [0, 256], sizes = [8, 128], strides = [1, 1]} : vector<8x384xf32> to vector<8x128xf32>
    %24 = arith.mulf %20, %23 : vector<8x128xf32>
    %25 = arith.addf %22, %24 : vector<8x128xf32>
    %26 = math.tanh %25 : vector<8x128xf32>
    %cst_12 = arith.constant 1.000000e+00 : f32
    %27 = vector.broadcast %cst_12 : f32 to vector<8x128xf32>
    %28 = arith.subf %27, %21 : vector<8x128xf32>
    %29 = arith.mulf %28, %26 : vector<8x128xf32>
    %30 = arith.mulf %21, %5 : vector<8x128xf32>
    %31 = arith.addf %29, %30 : vector<8x128xf32>
    %c0_13 = arith.constant 0 : index
    %c0_14 = arith.constant 0 : index
    %32 = vector.load %arg8[%c0_13, %c0_14] : memref<8x128xf32, #tpu.memory_space<vmem>>, vector<8x128xf32>
    tpu.vector_store %arg8[%c0_13, %c0_14], %31 {strides = array<i32>} : memref<8x128xf32, #tpu.memory_space<vmem>>, vector<8x128xf32>,
    %33 = vector.shape_cast %31 : vector<8x128xf32> to vector<1x8x128xf32>
    %34 = arith.index_cast %c0_i32 : i32 to index
    %c0_15 = arith.constant 0 : index
    %c0_16 = arith.constant 0 : index
    %35 = vector.load %arg7[%34, %c0_15, %c0_16] : memref<8x8x128xf32, #tpu.memory_space<vmem>>, vector<1x8x128xf32>
    tpu.vector_store %arg7[%34, %c0_15, %c0_16], %33 {strides = array<i32>} : memref<8x8x128xf32, #tpu.memory_space<vmem>>, vector<1x8x128xf32>,
    %c1_i32 = arith.constant 1 : i32
    %36 = arith.index_cast %c1_i32 : i32 to index
    %c0_17 = arith.constant 0 : index
    %c0_18 = arith.constant 0 : index
    %37 = vector.load %arg1[%36, %c0_17, %c0_18] : memref<8x8x384xf32, #tpu.memory_space<vmem>>, vector<1x8x384xf32>
    %38 = vector.shape_cast %37 : vector<1x8x384xf32> to vector<8x384xf32>
    %c0_19 = arith.constant 0 : index
    %c0_20 = arith.constant 0 : index
    %39 = vector.load %arg8[%c0_19, %c0_20] : memref<8x128xf32, #tpu.memory_space<vmem>>, vector<8x128xf32>
    %40 = arith.truncf %39 : vector<8x128xf32> to vector<8x128xbf16>
    %c0_21 = arith.constant 0 : index
    %c0_22 = arith.constant 0 : index
    %41 = vector.load %arg3[%c0_21, %c0_22] : memref<128x384xbf16, #tpu.memory_space<vmem>>, vector<128x384xbf16>
    %cst_23 = arith.constant dense<0.000000e+00> : vector<8x384xf32>
    %42 = tpu.matmul %40, %41, %cst_23 {dimension_numbers = #tpu.dot_dimension_numbers<[1], [0], [0], [1], [0, 0, 1, 1], [], []>} : vector<8x128xbf16>, vector<128x384xbf16>, vector<8x384xf32> -> vector<8x384xf32>
    %c0_24 = arith.constant 0 : index
    %c0_25 = arith.constant 0 : index
    %43 = vector.load %arg5[%c0_24, %c0_25] : memref<1x384xf32, #tpu.memory_space<vmem>>, vector<1x384xf32>
    %44 = vector.broadcast %43 : vector<1x384xf32> to vector<8x384xf32>
    %45 = arith.addf %42, %44 : vector<8x384xf32>
    %46 = vector.extract_strided_slice %38 {offsets = [0, 0], sizes = [8, 256], strides = [1, 1]} : vector<8x384xf32> to vector<8x256xf32>
    %47 = vector.extract_strided_slice %45 {offsets = [0, 0], sizes = [8, 256], strides = [1, 1]} : vector<8x384xf32> to vector<8x256xf32>
    %48 = arith.addf %46, %47 : vector<8x256xf32>
    %49 = arith.negf %48 : vector<8x256xf32>
    %50 = math.exp %49 : vector<8x256xf32>
    %cst_26 = arith.constant 1.000000e+00 : f32
    %51 = vector.broadcast %cst_26 : f32 to vector<8x256xf32>
    %52 = arith.addf %51, %50 : vector<8x256xf32>
    %53 = arith.divf %51, %52 : vector<8x256xf32>
    %54 = vector.extract_strided_slice %53 {offsets = [0, 0], sizes = [8, 128], strides = [1, 1]} : vector<8x256xf32> to vector<8x128xf32>
    %55 = vector.extract_strided_slice %53 {offsets = [0, 128], sizes = [8, 128], strides = [1, 1]} : vector<8x256xf32> to vector<8x128xf32>
    %56 = vector.extract_strided_slice %38 {offsets = [0, 256], sizes = [8, 128], strides = [1, 1]} : vector<8x384xf32> to vector<8x128xf32>
    %57 = vector.extract_strided_slice %45 {offsets = [0, 256], sizes = [8, 128], strides = [1, 1]} : vector<8x384xf32> to vector<8x128xf32>
    %58 = arith.mulf %54, %57 : vector<8x128xf32>
    %59 = arith.addf %56, %58 : vector<8x128xf32>
    %60 = math.tanh %59 : vector<8x128xf32>
    %cst_27 = arith.constant 1.000000e+00 : f32
    %61 = vector.broadcast %cst_27 : f32 to vector<8x128xf32>
    %62 = arith.subf %61, %55 : vector<8x128xf32>
    %63 = arith.mulf %62, %60 : vector<8x128xf32>
    %64 = arith.mulf %55, %39 : vector<8x128xf32>
    %65 = arith.addf %63, %64 : vector<8x128xf32>
    %c0_28 = arith.constant 0 : index
    %c0_29 = arith.constant 0 : index
    %66 = vector.load %arg8[%c0_28, %c0_29] : memref<8x128xf32, #tpu.memory_space<vmem>>, vector<8x128xf32>
    tpu.vector_store %arg8[%c0_28, %c0_29], %65 {strides = array<i32>} : memref<8x128xf32, #tpu.memory_space<vmem>>, vector<8x128xf32>,
    %67 = vector.shape_cast %65 : vector<8x128xf32> to vector<1x8x128xf32>
    %68 = arith.index_cast %c1_i32 : i32 to index
    %c0_30 = arith.constant 0 : index
    %c0_31 = arith.constant 0 : index
    %69 = vector.load %arg7[%68, %c0_30, %c0_31] : memref<8x8x128xf32, #tpu.memory_space<vmem>>, vector<1x8x128xf32>
    tpu.vector_store %arg7[%68, %c0_30, %c0_31], %67 {strides = array<i32>} : memref<8x8x128xf32, #tpu.memory_space<vmem>>, vector<1x8x128xf32>,
    %c2_i32 = arith.constant 2 : i32
    %70 = arith.index_cast %c2_i32 : i32 to index
    %c0_32 = arith.constant 0 : index
    %c0_33 = arith.constant 0 : index
    %71 = vector.load %arg1[%70, %c0_32, %c0_33] : memref<8x8x384xf32, #tpu.memory_space<vmem>>, vector<1x8x384xf32>
    %72 = vector.shape_cast %71 : vector<1x8x384xf32> to vector<8x384xf32>
    %c0_34 = arith.constant 0 : index
    %c0_35 = arith.constant 0 : index
    %73 = vector.load %arg8[%c0_34, %c0_35] : memref<8x128xf32, #tpu.memory_space<vmem>>, vector<8x128xf32>
    %74 = arith.truncf %73 : vector<8x128xf32> to vector<8x128xbf16>
    %c0_36 = arith.constant 0 : index
    %c0_37 = arith.constant 0 : index
    %75 = vector.load %arg3[%c0_36, %c0_37] : memref<128x384xbf16, #tpu.memory_space<vmem>>, vector<128x384xbf16>
    %cst_38 = arith.constant dense<0.000000e+00> : vector<8x384xf32>
    %76 = tpu.matmul %74, %75, %cst_38 {dimension_numbers = #tpu.dot_dimension_numbers<[1], [0], [0], [1], [0, 0, 1, 1], [], []>} : vector<8x128xbf16>, vector<128x384xbf16>, vector<8x384xf32> -> vector<8x384xf32>
    %c0_39 = arith.constant 0 : index
    %c0_40 = arith.constant 0 : index
    %77 = vector.load %arg5[%c0_39, %c0_40] : memref<1x384xf32, #tpu.memory_space<vmem>>, vector<1x384xf32>
    %78 = vector.broadcast %77 : vector<1x384xf32> to vector<8x384xf32>
    %79 = arith.addf %76, %78 : vector<8x384xf32>
    %80 = vector.extract_strided_slice %72 {offsets = [0, 0], sizes = [8, 256], strides = [1, 1]} : vector<8x384xf32> to vector<8x256xf32>
    %81 = vector.extract_strided_slice %79 {offsets = [0, 0], sizes = [8, 256], strides = [1, 1]} : vector<8x384xf32> to vector<8x256xf32>
    %82 = arith.addf %80, %81 : vector<8x256xf32>
    %83 = arith.negf %82 : vector<8x256xf32>
    %84 = math.exp %83 : vector<8x256xf32>
    %cst_41 = arith.constant 1.000000e+00 : f32
    %85 = vector.broadcast %cst_41 : f32 to vector<8x256xf32>
    %86 = arith.addf %85, %84 : vector<8x256xf32>
    %87 = arith.divf %85, %86 : vector<8x256xf32>
    %88 = vector.extract_strided_slice %87 {offsets = [0, 0], sizes = [8, 128], strides = [1, 1]} : vector<8x256xf32> to vector<8x128xf32>
    %89 = vector.extract_strided_slice %87 {offsets = [0, 128], sizes = [8, 128], strides = [1, 1]} : vector<8x256xf32> to vector<8x128xf32>
    %90 = vector.extract_strided_slice %72 {offsets = [0, 256], sizes = [8, 128], strides = [1, 1]} : vector<8x384xf32> to vector<8x128xf32>
    %91 = vector.extract_strided_slice %79 {offsets = [0, 256], sizes = [8, 128], strides = [1, 1]} : vector<8x384xf32> to vector<8x128xf32>
    %92 = arith.mulf %88, %91 : vector<8x128xf32>
    %93 = arith.addf %90, %92 : vector<8x128xf32>
    %94 = math.tanh %93 : vector<8x128xf32>
    %cst_42 = arith.constant 1.000000e+00 : f32
    %95 = vector.broadcast %cst_42 : f32 to vector<8x128xf32>
    %96 = arith.subf %95, %89 : vector<8x128xf32>
    %97 = arith.mulf %96, %94 : vector<8x128xf32>
    %98 = arith.mulf %89, %73 : vector<8x128xf32>
    %99 = arith.addf %97, %98 : vector<8x128xf32>
    %c0_43 = arith.constant 0 : index
    %c0_44 = arith.constant 0 : index
    %100 = vector.load %arg8[%c0_43, %c0_44] : memref<8x128xf32, #tpu.memory_space<vmem>>, vector<8x128xf32>
    tpu.vector_store %arg8[%c0_43, %c0_44], %99 {strides = array<i32>} : memref<8x128xf32, #tpu.memory_space<vmem>>, vector<8x128xf32>,
    %101 = vector.shape_cast %99 : vector<8x128xf32> to vector<1x8x128xf32>
    %102 = arith.index_cast %c2_i32 : i32 to index
    %c0_45 = arith.constant 0 : index
    %c0_46 = arith.constant 0 : index
    %103 = vector.load %arg7[%102, %c0_45, %c0_46] : memref<8x8x128xf32, #tpu.memory_space<vmem>>, vector<1x8x128xf32>
    tpu.vector_store %arg7[%102, %c0_45, %c0_46], %101 {strides = array<i32>} : memref<8x8x128xf32, #tpu.memory_space<vmem>>, vector<1x8x128xf32>,
    %c3_i32 = arith.constant 3 : i32
    %104 = arith.index_cast %c3_i32 : i32 to index
    %c0_47 = arith.constant 0 : index
    %c0_48 = arith.constant 0 : index
    %105 = vector.load %arg1[%104, %c0_47, %c0_48] : memref<8x8x384xf32, #tpu.memory_space<vmem>>, vector<1x8x384xf32>
    %106 = vector.shape_cast %105 : vector<1x8x384xf32> to vector<8x384xf32>
    %c0_49 = arith.constant 0 : index
    %c0_50 = arith.constant 0 : index
    %107 = vector.load %arg8[%c0_49, %c0_50] : memref<8x128xf32, #tpu.memory_space<vmem>>, vector<8x128xf32>
    %108 = arith.truncf %107 : vector<8x128xf32> to vector<8x128xbf16>
    %c0_51 = arith.constant 0 : index
    %c0_52 = arith.constant 0 : index
    %109 = vector.load %arg3[%c0_51, %c0_52] : memref<128x384xbf16, #tpu.memory_space<vmem>>, vector<128x384xbf16>
    %cst_53 = arith.constant dense<0.000000e+00> : vector<8x384xf32>
    %110 = tpu.matmul %108, %109, %cst_53 {dimension_numbers = #tpu.dot_dimension_numbers<[1], [0], [0], [1], [0, 0, 1, 1], [], []>} : vector<8x128xbf16>, vector<128x384xbf16>, vector<8x384xf32> -> vector<8x384xf32>
    %c0_54 = arith.constant 0 : index
    %c0_55 = arith.constant 0 : index
    %111 = vector.load %arg5[%c0_54, %c0_55] : memref<1x384xf32, #tpu.memory_space<vmem>>, vector<1x384xf32>
    %112 = vector.broadcast %111 : vector<1x384xf32> to vector<8x384xf32>
    %113 = arith.addf %110, %112 : vector<8x384xf32>
    %114 = vector.extract_strided_slice %106 {offsets = [0, 0], sizes = [8, 256], strides = [1, 1]} : vector<8x384xf32> to vector<8x256xf32>
    %115 = vector.extract_strided_slice %113 {offsets = [0, 0], sizes = [8, 256], strides = [1, 1]} : vector<8x384xf32> to vector<8x256xf32>
    %116 = arith.addf %114, %115 : vector<8x256xf32>
    %117 = arith.negf %116 : vector<8x256xf32>
    %118 = math.exp %117 : vector<8x256xf32>
    %cst_56 = arith.constant 1.000000e+00 : f32
    %119 = vector.broadcast %cst_56 : f32 to vector<8x256xf32>
    %120 = arith.addf %119, %118 : vector<8x256xf32>
    %121 = arith.divf %119, %120 : vector<8x256xf32>
    %122 = vector.extract_strided_slice %121 {offsets = [0, 0], sizes = [8, 128], strides = [1, 1]} : vector<8x256xf32> to vector<8x128xf32>
    %123 = vector.extract_strided_slice %121 {offsets = [0, 128], sizes = [8, 128], strides = [1, 1]} : vector<8x256xf32> to vector<8x128xf32>
    %124 = vector.extract_strided_slice %106 {offsets = [0, 256], sizes = [8, 128], strides = [1, 1]} : vector<8x384xf32> to vector<8x128xf32>
    %125 = vector.extract_strided_slice %113 {offsets = [0, 256], sizes = [8, 128], strides = [1, 1]} : vector<8x384xf32> to vector<8x128xf32>
    %126 = arith.mulf %122, %125 : vector<8x128xf32>
    %127 = arith.addf %124, %126 : vector<8x128xf32>
    %128 = math.tanh %127 : vector<8x128xf32>
    %cst_57 = arith.constant 1.000000e+00 : f32
    %129 = vector.broadcast %cst_57 : f32 to vector<8x128xf32>
    %130 = arith.subf %129, %123 : vector<8x128xf32>
    %131 = arith.mulf %130, %128 : vector<8x128xf32>
    %132 = arith.mulf %123, %107 : vector<8x128xf32>
    %133 = arith.addf %131, %132 : vector<8x128xf32>
    %c0_58 = arith.constant 0 : index
    %c0_59 = arith.constant 0 : index
    %134 = vector.load %arg8[%c0_58, %c0_59] : memref<8x128xf32, #tpu.memory_space<vmem>>, vector<8x128xf32>
    tpu.vector_store %arg8[%c0_58, %c0_59], %133 {strides = array<i32>} : memref<8x128xf32, #tpu.memory_space<vmem>>, vector<8x128xf32>,
    %135 = vector.shape_cast %133 : vector<8x128xf32> to vector<1x8x128xf32>
    %136 = arith.index_cast %c3_i32 : i32 to index
    %c0_60 = arith.constant 0 : index
    %c0_61 = arith.constant 0 : index
    %137 = vector.load %arg7[%136, %c0_60, %c0_61] : memref<8x8x128xf32, #tpu.memory_space<vmem>>, vector<1x8x128xf32>
    tpu.vector_store %arg7[%136, %c0_60, %c0_61], %135 {strides = array<i32>} : memref<8x8x128xf32, #tpu.memory_space<vmem>>, vector<1x8x128xf32>,
    %c4_i32 = arith.constant 4 : i32
    %138 = arith.index_cast %c4_i32 : i32 to index
    %c0_62 = arith.constant 0 : index
    %c0_63 = arith.constant 0 : index
    %139 = vector.load %arg1[%138, %c0_62, %c0_63] : memref<8x8x384xf32, #tpu.memory_space<vmem>>, vector<1x8x384xf32>
    %140 = vector.shape_cast %139 : vector<1x8x384xf32> to vector<8x384xf32>
    %c0_64 = arith.constant 0 : index
    %c0_65 = arith.constant 0 : index
    %141 = vector.load %arg8[%c0_64, %c0_65] : memref<8x128xf32, #tpu.memory_space<vmem>>, vector<8x128xf32>
    %142 = arith.truncf %141 : vector<8x128xf32> to vector<8x128xbf16>
    %c0_66 = arith.constant 0 : index
    %c0_67 = arith.constant 0 : index
    %143 = vector.load %arg3[%c0_66, %c0_67] : memref<128x384xbf16, #tpu.memory_space<vmem>>, vector<128x384xbf16>
    %cst_68 = arith.constant dense<0.000000e+00> : vector<8x384xf32>
    %144 = tpu.matmul %142, %143, %cst_68 {dimension_numbers = #tpu.dot_dimension_numbers<[1], [0], [0], [1], [0, 0, 1, 1], [], []>} : vector<8x128xbf16>, vector<128x384xbf16>, vector<8x384xf32> -> vector<8x384xf32>
    %c0_69 = arith.constant 0 : index
    %c0_70 = arith.constant 0 : index
    %145 = vector.load %arg5[%c0_69, %c0_70] : memref<1x384xf32, #tpu.memory_space<vmem>>, vector<1x384xf32>
    %146 = vector.broadcast %145 : vector<1x384xf32> to vector<8x384xf32>
    %147 = arith.addf %144, %146 : vector<8x384xf32>
    %148 = vector.extract_strided_slice %140 {offsets = [0, 0], sizes = [8, 256], strides = [1, 1]} : vector<8x384xf32> to vector<8x256xf32>
    %149 = vector.extract_strided_slice %147 {offsets = [0, 0], sizes = [8, 256], strides = [1, 1]} : vector<8x384xf32> to vector<8x256xf32>
    %150 = arith.addf %148, %149 : vector<8x256xf32>
    %151 = arith.negf %150 : vector<8x256xf32>
    %152 = math.exp %151 : vector<8x256xf32>
    %cst_71 = arith.constant 1.000000e+00 : f32
    %153 = vector.broadcast %cst_71 : f32 to vector<8x256xf32>
    %154 = arith.addf %153, %152 : vector<8x256xf32>
    %155 = arith.divf %153, %154 : vector<8x256xf32>
    %156 = vector.extract_strided_slice %155 {offsets = [0, 0], sizes = [8, 128], strides = [1, 1]} : vector<8x256xf32> to vector<8x128xf32>
    %157 = vector.extract_strided_slice %155 {offsets = [0, 128], sizes = [8, 128], strides = [1, 1]} : vector<8x256xf32> to vector<8x128xf32>
    %158 = vector.extract_strided_slice %140 {offsets = [0, 256], sizes = [8, 128], strides = [1, 1]} : vector<8x384xf32> to vector<8x128xf32>
    %159 = vector.extract_strided_slice %147 {offsets = [0, 256], sizes = [8, 128], strides = [1, 1]} : vector<8x384xf32> to vector<8x128xf32>
    %160 = arith.mulf %156, %159 : vector<8x128xf32>
    %161 = arith.addf %158, %160 : vector<8x128xf32>
    %162 = math.tanh %161 : vector<8x128xf32>
    %cst_72 = arith.constant 1.000000e+00 : f32
    %163 = vector.broadcast %cst_72 : f32 to vector<8x128xf32>
    %164 = arith.subf %163, %157 : vector<8x128xf32>
    %165 = arith.mulf %164, %162 : vector<8x128xf32>
    %166 = arith.mulf %157, %141 : vector<8x128xf32>
    %167 = arith.addf %165, %166 : vector<8x128xf32>
    %c0_73 = arith.constant 0 : index
    %c0_74 = arith.constant 0 : index
    %168 = vector.load %arg8[%c0_73, %c0_74] : memref<8x128xf32, #tpu.memory_space<vmem>>, vector<8x128xf32>
    tpu.vector_store %arg8[%c0_73, %c0_74], %167 {strides = array<i32>} : memref<8x128xf32, #tpu.memory_space<vmem>>, vector<8x128xf32>,
    %169 = vector.shape_cast %167 : vector<8x128xf32> to vector<1x8x128xf32>
    %170 = arith.index_cast %c4_i32 : i32 to index
    %c0_75 = arith.constant 0 : index
    %c0_76 = arith.constant 0 : index
    %171 = vector.load %arg7[%170, %c0_75, %c0_76] : memref<8x8x128xf32, #tpu.memory_space<vmem>>, vector<1x8x128xf32>
    tpu.vector_store %arg7[%170, %c0_75, %c0_76], %169 {strides = array<i32>} : memref<8x8x128xf32, #tpu.memory_space<vmem>>, vector<1x8x128xf32>,
    %c5_i32 = arith.constant 5 : i32
    %172 = arith.index_cast %c5_i32 : i32 to index
    %c0_77 = arith.constant 0 : index
    %c0_78 = arith.constant 0 : index
    %173 = vector.load %arg1[%172, %c0_77, %c0_78] : memref<8x8x384xf32, #tpu.memory_space<vmem>>, vector<1x8x384xf32>
    %174 = vector.shape_cast %173 : vector<1x8x384xf32> to vector<8x384xf32>
    %c0_79 = arith.constant 0 : index
    %c0_80 = arith.constant 0 : index
    %175 = vector.load %arg8[%c0_79, %c0_80] : memref<8x128xf32, #tpu.memory_space<vmem>>, vector<8x128xf32>
    %176 = arith.truncf %175 : vector<8x128xf32> to vector<8x128xbf16>
    %c0_81 = arith.constant 0 : index
    %c0_82 = arith.constant 0 : index
    %177 = vector.load %arg3[%c0_81, %c0_82] : memref<128x384xbf16, #tpu.memory_space<vmem>>, vector<128x384xbf16>
    %cst_83 = arith.constant dense<0.000000e+00> : vector<8x384xf32>
    %178 = tpu.matmul %176, %177, %cst_83 {dimension_numbers = #tpu.dot_dimension_numbers<[1], [0], [0], [1], [0, 0, 1, 1], [], []>} : vector<8x128xbf16>, vector<128x384xbf16>, vector<8x384xf32> -> vector<8x384xf32>
    %c0_84 = arith.constant 0 : index
    %c0_85 = arith.constant 0 : index
    %179 = vector.load %arg5[%c0_84, %c0_85] : memref<1x384xf32, #tpu.memory_space<vmem>>, vector<1x384xf32>
    %180 = vector.broadcast %179 : vector<1x384xf32> to vector<8x384xf32>
    %181 = arith.addf %178, %180 : vector<8x384xf32>
    %182 = vector.extract_strided_slice %174 {offsets = [0, 0], sizes = [8, 256], strides = [1, 1]} : vector<8x384xf32> to vector<8x256xf32>
    %183 = vector.extract_strided_slice %181 {offsets = [0, 0], sizes = [8, 256], strides = [1, 1]} : vector<8x384xf32> to vector<8x256xf32>
    %184 = arith.addf %182, %183 : vector<8x256xf32>
    %185 = arith.negf %184 : vector<8x256xf32>
    %186 = math.exp %185 : vector<8x256xf32>
    %cst_86 = arith.constant 1.000000e+00 : f32
    %187 = vector.broadcast %cst_86 : f32 to vector<8x256xf32>
    %188 = arith.addf %187, %186 : vector<8x256xf32>
    %189 = arith.divf %187, %188 : vector<8x256xf32>
    %190 = vector.extract_strided_slice %189 {offsets = [0, 0], sizes = [8, 128], strides = [1, 1]} : vector<8x256xf32> to vector<8x128xf32>
    %191 = vector.extract_strided_slice %189 {offsets = [0, 128], sizes = [8, 128], strides = [1, 1]} : vector<8x256xf32> to vector<8x128xf32>
    %192 = vector.extract_strided_slice %174 {offsets = [0, 256], sizes = [8, 128], strides = [1, 1]} : vector<8x384xf32> to vector<8x128xf32>
    %193 = vector.extract_strided_slice %181 {offsets = [0, 256], sizes = [8, 128], strides = [1, 1]} : vector<8x384xf32> to vector<8x128xf32>
    %194 = arith.mulf %190, %193 : vector<8x128xf32>
    %195 = arith.addf %192, %194 : vector<8x128xf32>
    %196 = math.tanh %195 : vector<8x128xf32>
    %cst_87 = arith.constant 1.000000e+00 : f32
    %197 = vector.broadcast %cst_87 : f32 to vector<8x128xf32>
    %198 = arith.subf %197, %191 : vector<8x128xf32>
    %199 = arith.mulf %198, %196 : vector<8x128xf32>
    %200 = arith.mulf %191, %175 : vector<8x128xf32>
    %201 = arith.addf %199, %200 : vector<8x128xf32>
    %c0_88 = arith.constant 0 : index
    %c0_89 = arith.constant 0 : index
    %202 = vector.load %arg8[%c0_88, %c0_89] : memref<8x128xf32, #tpu.memory_space<vmem>>, vector<8x128xf32>
    tpu.vector_store %arg8[%c0_88, %c0_89], %201 {strides = array<i32>} : memref<8x128xf32, #tpu.memory_space<vmem>>, vector<8x128xf32>,
    %203 = vector.shape_cast %201 : vector<8x128xf32> to vector<1x8x128xf32>
    %204 = arith.index_cast %c5_i32 : i32 to index
    %c0_90 = arith.constant 0 : index
    %c0_91 = arith.constant 0 : index
    %205 = vector.load %arg7[%204, %c0_90, %c0_91] : memref<8x8x128xf32, #tpu.memory_space<vmem>>, vector<1x8x128xf32>
    tpu.vector_store %arg7[%204, %c0_90, %c0_91], %203 {strides = array<i32>} : memref<8x8x128xf32, #tpu.memory_space<vmem>>, vector<1x8x128xf32>,
    %c6_i32 = arith.constant 6 : i32
    %206 = arith.index_cast %c6_i32 : i32 to index
    %c0_92 = arith.constant 0 : index
    %c0_93 = arith.constant 0 : index
    %207 = vector.load %arg1[%206, %c0_92, %c0_93] : memref<8x8x384xf32, #tpu.memory_space<vmem>>, vector<1x8x384xf32>
    %208 = vector.shape_cast %207 : vector<1x8x384xf32> to vector<8x384xf32>
    %c0_94 = arith.constant 0 : index
    %c0_95 = arith.constant 0 : index
    %209 = vector.load %arg8[%c0_94, %c0_95] : memref<8x128xf32, #tpu.memory_space<vmem>>, vector<8x128xf32>
    %210 = arith.truncf %209 : vector<8x128xf32> to vector<8x128xbf16>
    %c0_96 = arith.constant 0 : index
    %c0_97 = arith.constant 0 : index
    %211 = vector.load %arg3[%c0_96, %c0_97] : memref<128x384xbf16, #tpu.memory_space<vmem>>, vector<128x384xbf16>
    %cst_98 = arith.constant dense<0.000000e+00> : vector<8x384xf32>
    %212 = tpu.matmul %210, %211, %cst_98 {dimension_numbers = #tpu.dot_dimension_numbers<[1], [0], [0], [1], [0, 0, 1, 1], [], []>} : vector<8x128xbf16>, vector<128x384xbf16>, vector<8x384xf32> -> vector<8x384xf32>
    %c0_99 = arith.constant 0 : index
    %c0_100 = arith.constant 0 : index
    %213 = vector.load %arg5[%c0_99, %c0_100] : memref<1x384xf32, #tpu.memory_space<vmem>>, vector<1x384xf32>
    %214 = vector.broadcast %213 : vector<1x384xf32> to vector<8x384xf32>
    %215 = arith.addf %212, %214 : vector<8x384xf32>
    %216 = vector.extract_strided_slice %208 {offsets = [0, 0], sizes = [8, 256], strides = [1, 1]} : vector<8x384xf32> to vector<8x256xf32>
    %217 = vector.extract_strided_slice %215 {offsets = [0, 0], sizes = [8, 256], strides = [1, 1]} : vector<8x384xf32> to vector<8x256xf32>
    %218 = arith.addf %216, %217 : vector<8x256xf32>
    %219 = arith.negf %218 : vector<8x256xf32>
    %220 = math.exp %219 : vector<8x256xf32>
    %cst_101 = arith.constant 1.000000e+00 : f32
    %221 = vector.broadcast %cst_101 : f32 to vector<8x256xf32>
    %222 = arith.addf %221, %220 : vector<8x256xf32>
    %223 = arith.divf %221, %222 : vector<8x256xf32>
    %224 = vector.extract_strided_slice %223 {offsets = [0, 0], sizes = [8, 128], strides = [1, 1]} : vector<8x256xf32> to vector<8x128xf32>
    %225 = vector.extract_strided_slice %223 {offsets = [0, 128], sizes = [8, 128], strides = [1, 1]} : vector<8x256xf32> to vector<8x128xf32>
    %226 = vector.extract_strided_slice %208 {offsets = [0, 256], sizes = [8, 128], strides = [1, 1]} : vector<8x384xf32> to vector<8x128xf32>
    %227 = vector.extract_strided_slice %215 {offsets = [0, 256], sizes = [8, 128], strides = [1, 1]} : vector<8x384xf32> to vector<8x128xf32>
    %228 = arith.mulf %224, %227 : vector<8x128xf32>
    %229 = arith.addf %226, %228 : vector<8x128xf32>
    %230 = math.tanh %229 : vector<8x128xf32>
    %cst_102 = arith.constant 1.000000e+00 : f32
    %231 = vector.broadcast %cst_102 : f32 to vector<8x128xf32>
    %232 = arith.subf %231, %225 : vector<8x128xf32>
    %233 = arith.mulf %232, %230 : vector<8x128xf32>
    %234 = arith.mulf %225, %209 : vector<8x128xf32>
    %235 = arith.addf %233, %234 : vector<8x128xf32>
    %c0_103 = arith.constant 0 : index
    %c0_104 = arith.constant 0 : index
    %236 = vector.load %arg8[%c0_103, %c0_104] : memref<8x128xf32, #tpu.memory_space<vmem>>, vector<8x128xf32>
    tpu.vector_store %arg8[%c0_103, %c0_104], %235 {strides = array<i32>} : memref<8x128xf32, #tpu.memory_space<vmem>>, vector<8x128xf32>,
    %237 = vector.shape_cast %235 : vector<8x128xf32> to vector<1x8x128xf32>
    %238 = arith.index_cast %c6_i32 : i32 to index
    %c0_105 = arith.constant 0 : index
    %c0_106 = arith.constant 0 : index
    %239 = vector.load %arg7[%238, %c0_105, %c0_106] : memref<8x8x128xf32, #tpu.memory_space<vmem>>, vector<1x8x128xf32>
    tpu.vector_store %arg7[%238, %c0_105, %c0_106], %237 {strides = array<i32>} : memref<8x8x128xf32, #tpu.memory_space<vmem>>, vector<1x8x128xf32>,
    %c7_i32 = arith.constant 7 : i32
    %240 = arith.index_cast %c7_i32 : i32 to index
    %c0_107 = arith.constant 0 : index
    %c0_108 = arith.constant 0 : index
    %241 = vector.load %arg1[%240, %c0_107, %c0_108] : memref<8x8x384xf32, #tpu.memory_space<vmem>>, vector<1x8x384xf32>
    %242 = vector.shape_cast %241 : vector<1x8x384xf32> to vector<8x384xf32>
    %c0_109 = arith.constant 0 : index
    %c0_110 = arith.constant 0 : index
    %243 = vector.load %arg8[%c0_109, %c0_110] : memref<8x128xf32, #tpu.memory_space<vmem>>, vector<8x128xf32>
    %244 = arith.truncf %243 : vector<8x128xf32> to vector<8x128xbf16>
    %c0_111 = arith.constant 0 : index
    %c0_112 = arith.constant 0 : index
    %245 = vector.load %arg3[%c0_111, %c0_112] : memref<128x384xbf16, #tpu.memory_space<vmem>>, vector<128x384xbf16>
    %cst_113 = arith.constant dense<0.000000e+00> : vector<8x384xf32>
    %246 = tpu.matmul %244, %245, %cst_113 {dimension_numbers = #tpu.dot_dimension_numbers<[1], [0], [0], [1], [0, 0, 1, 1], [], []>} : vector<8x128xbf16>, vector<128x384xbf16>, vector<8x384xf32> -> vector<8x384xf32>
    %c0_114 = arith.constant 0 : index
    %c0_115 = arith.constant 0 : index
    %247 = vector.load %arg5[%c0_114, %c0_115] : memref<1x384xf32, #tpu.memory_space<vmem>>, vector<1x384xf32>
    %248 = vector.broadcast %247 : vector<1x384xf32> to vector<8x384xf32>
    %249 = arith.addf %246, %248 : vector<8x384xf32>
    %250 = vector.extract_strided_slice %242 {offsets = [0, 0], sizes = [8, 256], strides = [1, 1]} : vector<8x384xf32> to vector<8x256xf32>
    %251 = vector.extract_strided_slice %249 {offsets = [0, 0], sizes = [8, 256], strides = [1, 1]} : vector<8x384xf32> to vector<8x256xf32>
    %252 = arith.addf %250, %251 : vector<8x256xf32>
    %253 = arith.negf %252 : vector<8x256xf32>
    %254 = math.exp %253 : vector<8x256xf32>
    %cst_116 = arith.constant 1.000000e+00 : f32
    %255 = vector.broadcast %cst_116 : f32 to vector<8x256xf32>
    %256 = arith.addf %255, %254 : vector<8x256xf32>
    %257 = arith.divf %255, %256 : vector<8x256xf32>
    %258 = vector.extract_strided_slice %257 {offsets = [0, 0], sizes = [8, 128], strides = [1, 1]} : vector<8x256xf32> to vector<8x128xf32>
    %259 = vector.extract_strided_slice %257 {offsets = [0, 128], sizes = [8, 128], strides = [1, 1]} : vector<8x256xf32> to vector<8x128xf32>
    %260 = vector.extract_strided_slice %242 {offsets = [0, 256], sizes = [8, 128], strides = [1, 1]} : vector<8x384xf32> to vector<8x128xf32>
    %261 = vector.extract_strided_slice %249 {offsets = [0, 256], sizes = [8, 128], strides = [1, 1]} : vector<8x384xf32> to vector<8x128xf32>
    %262 = arith.mulf %258, %261 : vector<8x128xf32>
    %263 = arith.addf %260, %262 : vector<8x128xf32>
    %264 = math.tanh %263 : vector<8x128xf32>
    %cst_117 = arith.constant 1.000000e+00 : f32
    %265 = vector.broadcast %cst_117 : f32 to vector<8x128xf32>
    %266 = arith.subf %265, %259 : vector<8x128xf32>
    %267 = arith.mulf %266, %264 : vector<8x128xf32>
    %268 = arith.mulf %259, %243 : vector<8x128xf32>
    %269 = arith.addf %267, %268 : vector<8x128xf32>
    %c0_118 = arith.constant 0 : index
    %c0_119 = arith.constant 0 : index
    %270 = vector.load %arg8[%c0_118, %c0_119] : memref<8x128xf32, #tpu.memory_space<vmem>>, vector<8x128xf32>
    tpu.vector_store %arg8[%c0_118, %c0_119], %269 {strides = array<i32>} : memref<8x128xf32, #tpu.memory_space<vmem>>, vector<8x128xf32>,
    %271 = vector.shape_cast %269 : vector<8x128xf32> to vector<1x8x128xf32>
    %272 = arith.index_cast %c7_i32 : i32 to index
    %c0_120 = arith.constant 0 : index
    %c0_121 = arith.constant 0 : index
    %273 = vector.load %arg7[%272, %c0_120, %c0_121] : memref<8x8x128xf32, #tpu.memory_space<vmem>>, vector<1x8x128xf32>
    tpu.vector_store %arg7[%272, %c0_120, %c0_121], %271 {strides = array<i32>} : memref<8x8x128xf32, #tpu.memory_space<vmem>>, vector<1x8x128xf32>,
    %c8_i32 = arith.constant 8 : i32
    return
  }
  func.func @transform_0(%arg0: i32) -> (i32, i32, i32) {
    %c0_i32 = arith.constant 0 : i32
    %c0_i32_0 = arith.constant 0 : i32
    %c0_i32_1 = arith.constant 0 : i32
    return %c0_i32, %arg0, %c0_i32_0 : i32, i32, i32
  }
  func.func @transform_1(%arg0: i32) -> (i32, i32) {
    %c0_i32 = arith.constant 0 : i32
    %c0_i32_0 = arith.constant 0 : i32
    return %arg0, %c0_i32 : i32, i32
  }
  func.func @transform_2(%arg0: i32) -> (i32, i32) {
    %c0_i32 = arith.constant 0 : i32
    %c0_i32_0 = arith.constant 0 : i32
    %c0_i32_1 = arith.constant 0 : i32
    return %c0_i32, %c0_i32_0 : i32, i32
  }
  func.func @transform_3(%arg0: i32) -> (i32, i32) {
    %c0_i32 = arith.constant 0 : i32
    %c0_i32_0 = arith.constant 0 : i32
    %c0_i32_1 = arith.constant 0 : i32
    return %c0_i32, %c0_i32_0 : i32, i32
  }
  func.func @transform_4(%arg0: i32) -> (i32, i32) {
    %c0_i32 = arith.constant 0 : i32
    %c0_i32_0 = arith.constant 0 : i32
    %c0_i32_1 = arith.constant 0 : i32
    return %c0_i32, %c0_i32_0 : i32, i32
  }
  func.func @transform_5(%arg0: i32) -> (i32, i32) {
    %c0_i32 = arith.constant 0 : i32
    %c0_i32_0 = arith.constant 0 : i32
    %c0_i32_1 = arith.constant 0 : i32
    return %c0_i32, %c0_i32_0 : i32, i32
  }
  func.func @transform_6(%arg0: i32) -> (i32, i32, i32) {
    %c0_i32 = arith.constant 0 : i32
    %c0_i32_0 = arith.constant 0 : i32
    %c0_i32_1 = arith.constant 0 : i32
    return %c0_i32, %arg0, %c0_i32_0 : i32, i32, i32
  }
}

</mosaic_0001>

<llo_original>
// kernel: tpu_custom_call.1
$region0: #{tpu_custom_call.1}
  #allocation0 [shape = 'u32[]', space=smem, size = 0x4, offset = 0x4, fixed_abs, tag = 'smem constant byte address 0x4 - core index']
  #allocation1 [shape = 'u32[144,128]{1,0:T(1,128)}', space=vmem, size = 0x12000, scoped, tag = 'internal scratch']
  #allocation2 [shape = 'f32[8,128]{1,0:T(8,128)}', space=vmem, size = 0x1000, scoped, tag = 'scratch operand']
  %s0 = inlined_call_operand.hbm [shape: f32[8,8,384], index: 0, kind: input, shape index: {}]
  %s1 = inlined_call_operand.hbm [shape: f32[8,128], index: 1, kind: input, shape index: {}]
  %s2 = inlined_call_operand.hbm [shape: bf16[128,384], index: 2, kind: input, shape index: {}]
  %s3 = inlined_call_operand.hbm [shape: bf16[128,384], index: 3, kind: input, shape index: {}]
  %s4 = inlined_call_operand.vmem [shape: f32[1,384], index: 4, kind: input, shape index: {}]
  %s5 = inlined_call_operand.vmem [shape: f32[1,384], index: 5, kind: input, shape index: {}]
  %s6 = inlined_call_operand.hbm [shape: f32[8,8,128], index: 6, kind: output, shape index: {}]
  %s7 = sld [smem:[#allocation0]]
  $region50: #{tpu_custom_call.1} parent=0
    _
  %s9 = ssub.s32 1, %s7
  %s10 = scalar_select 0, %s9, %s7
  $region1: #{tpu_custom_call.1} parent=0
    #allocation3 [shape = 'u8[98304]{0}', space=vmem, size = 0x18000, scoped, tag = 'input window, operand 0, single buffered']
    #allocation4 [shape = 's32[1]{0}', space=sflag, size = 0x4, scoped, tag = 'scoped memory for tpu_custom_call.1']
    #allocation5 [shape = 's32[1]{0}', space=sflag, size = 0x4, scoped, tag = 'scoped memory for tpu_custom_call.1']
    #allocation6 [shape = 'u8[4096]{0}', space=vmem, size = 0x1000, scoped, tag = 'input window, operand 1, single buffered']
    #allocation7 [shape = 's32[1]{0}', space=sflag, size = 0x4, scoped, tag = 'scoped memory for tpu_custom_call.1']
    #allocation8 [shape = 'u8[98304]{0}', space=vmem, size = 0x18000, scoped, tag = 'input window, operand 2, single buffered']
    #allocation9 [shape = 'u8[98304]{0}', space=vmem, size = 0x18000, scoped, tag = 'input window, operand 3, single buffered']
    #allocation10 [shape = 's32[1]{0}', space=sflag, size = 0x4, scoped, tag = 'scoped memory for tpu_custom_call.1']
    #allocation11 [shape = 'u8[32768]{0}', space=vmem, size = 0x8000, scoped, tag = 'output window, operand 0, single buffered']
    %11 = vsyncpa [#allocation4], 0
    %12 = vsyncpa [#allocation7], 0
    %13 = vsyncpa [#allocation10], 0
    %14 = vsyncpa [#allocation5], 0
    // Predicated region
    $region2: #{tpu_custom_call.1} parent=1 // pred_check
      _
    $region3: #{tpu_custom_call.1} parent=1 // pred_check_branch
      %16 = sbr.rel (0) target = $region5
    $region4: #{tpu_custom_call.1} parent=1 // pred_region
      %s18 = ssub.s32 3072, 3072
      %19 = vsyncadd [#allocation4], %s18
      %s20 = sshll.u32 [#allocation3], 4
      %s21 = int_to_ptr.vmem [resolvable:$true] %s20
      %26 = dma.hbm_to_vmem [thread:$0]  %s0, 3072, %s21, [#allocation4], 384, 384, 24
    $region5: #{tpu_custom_call.1} parent=1 // pred_fallthru
      _
    // Predicated region
    $region6: #{tpu_custom_call.1} parent=1 // pred_check
      _
    $region7: #{tpu_custom_call.1} parent=1 // pred_check_branch
      %28 = sbr.rel (0) target = $region9
    $region8: #{tpu_custom_call.1} parent=1 // pred_region
      %s30 = ssub.s32 128, 128
      %31 = vsyncadd [#allocation7], %s30
      %s33 = sshll.u32 [#allocation6], 4
      %s34 = int_to_ptr.vmem [resolvable:$true] %s33
      %36 = dma.hbm_to_vmem [thread:$0]  %s1, 128, %s34, [#allocation7]
    $region9: #{tpu_custom_call.1} parent=1 // pred_fallthru
      _
    // Predicated region
    $region10: #{tpu_custom_call.1} parent=1 // pred_check
      _
    $region11: #{tpu_custom_call.1} parent=1 // pred_check_branch
      %38 = sbr.rel (0) target = $region13
    $region12: #{tpu_custom_call.1} parent=1 // pred_region
      %s40 = ssub.s32 3072, 3072
      %41 = vsyncadd [#allocation7], %s40
      %s42 = sshll.u32 [#allocation8], 4
      %s43 = int_to_ptr.vmem [resolvable:$true] %s42
      %48 = dma.hbm_to_vmem [thread:$0]  %s2, 3072, %s43, [#allocation7], 192, 192, 12
    $region13: #{tpu_custom_call.1} parent=1 // pred_fallthru
      _
    // Predicated region
    $region14: #{tpu_custom_call.1} parent=1 // pred_check
      _
    $region15: #{tpu_custom_call.1} parent=1 // pred_check_branch
      %50 = sbr.rel (0) target = $region17
    $region16: #{tpu_custom_call.1} parent=1 // pred_region
      %s52 = ssub.s32 3072, 3072
      %53 = vsyncadd [#allocation10], %s52
      %s54 = sshll.u32 [#allocation9], 4
      %s55 = int_to_ptr.vmem [resolvable:$true] %s54
      %60 = dma.hbm_to_vmem [thread:$0]  %s3, 3072, %s55, [#allocation10], 192, 192, 12
    $region17: #{tpu_custom_call.1} parent=1 // pred_fallthru
      _
    // Predicated region
    $region18: #{tpu_custom_call.1} parent=1 // pred_check
      _
    $region19: #{tpu_custom_call.1} parent=1 // pred_check_branch
      %62 = sbr.rel (0) target = $region21
    $region20: #{tpu_custom_call.1} parent=1 // pred_region
      _
    $region21: #{tpu_custom_call.1} parent=1 // pred_fallthru
      _
    // Predicated region
    $region22: #{tpu_custom_call.1} parent=1 // pred_check
      _
    $region23: #{tpu_custom_call.1} parent=1 // pred_check_branch
      %64 = sbr.rel (0) target = $region25
    $region24: #{tpu_custom_call.1} parent=1 // pred_region
      _
    $region25: #{tpu_custom_call.1} parent=1 // pred_fallthru
      _
    // Predicated region
    $region26: #{tpu_custom_call.1} parent=1 // pred_check
      _
    $region27: #{tpu_custom_call.1} parent=1 // pred_check_branch
      %66 = sbr.rel (0) target = $region29
    $region28: #{tpu_custom_call.1} parent=1 // pred_region
      %67 = dma.done [#allocation4], 3072
    $region29: #{tpu_custom_call.1} parent=1 // pred_fallthru
      _
    // Predicated region
    $region30: #{tpu_custom_call.1} parent=1 // pred_check
      _
    $region31: #{tpu_custom_call.1} parent=1 // pred_check_branch
      %69 = sbr.rel (0) target = $region33
    $region32: #{tpu_custom_call.1} parent=1 // pred_region
      %70 = dma.done [#allocation7], 128
    $region33: #{tpu_custom_call.1} parent=1 // pred_fallthru
      _
    // Predicated region
    $region34: #{tpu_custom_call.1} parent=1 // pred_check
      _
    $region35: #{tpu_custom_call.1} parent=1 // pred_check_branch
      %72 = sbr.rel (0) target = $region37
    $region36: #{tpu_custom_call.1} parent=1 // pred_region
      %73 = dma.done [#allocation7], 3072
    $region37: #{tpu_custom_call.1} parent=1 // pred_fallthru
      _
    // Predicated region
    $region38: #{tpu_custom_call.1} parent=1 // pred_check
      _
    $region39: #{tpu_custom_call.1} parent=1 // pred_check_branch
      %75 = sbr.rel (0) target = $region41
    $region40: #{tpu_custom_call.1} parent=1 // pred_region
      %76 = dma.done [#allocation10], 3072
    $region41: #{tpu_custom_call.1} parent=1 // pred_fallthru
      _
    %v78 = vld [vmem:[#allocation6] sm:$0xff]
    %79 = vst [vmem:[#allocation2] sm:$0xff] %v78
    %v80 = vld [vmem:[#allocation3] sm:$0xff]
    %v81 = vld [vmem:[#allocation3 + $0x8] sm:$0xff]
    %v82 = vld [vmem:[#allocation3 + $0x10] sm:$0xff]
    %v83 = vld [vmem:[#allocation2] sm:$0xff]
    %v84 = vpack.c.bf16 %v83, %v83
    %v85 = vld [vmem:[#allocation8] sm:$0xff]
    %v86 = vld [vmem:[#allocation8 + $0x8] sm:$0xf]
    %v87 = vld [vmem:[#allocation8 + $0xc] sm:$0xff]
    %v88 = vld [vmem:[#allocation8 + $0x14] sm:$0xf]
    %v89 = vld [vmem:[#allocation8 + $0x18] sm:$0xff]
    %v90 = vld [vmem:[#allocation8 + $0x20] sm:$0xf]
    %v91 = vld [vmem:[#allocation8 + $0x24] sm:$0xff]
    %v92 = vld [vmem:[#allocation8 + $0x2c] sm:$0xf]
    %v93 = vld [vmem:[#allocation8 + $0x30] sm:$0xff]
    %v94 = vld [vmem:[#allocation8 + $0x38] sm:$0xf]
    %v95 = vld [vmem:[#allocation8 + $0x3c] sm:$0xff]
    %v96 = vld [vmem:[#allocation8 + $0x44] sm:$0xf]
    %v97 = vld [vmem:[#allocation8 + $0x48] sm:$0xff]
    %v98 = vld [vmem:[#allocation8 + $0x50] sm:$0xf]
    %v99 = vld [vmem:[#allocation8 + $0x54] sm:$0xff]
    %v100 = vld [vmem:[#allocation8 + $0x5c] sm:$0xf]
    %v101 = vld [vmem:[#allocation8 + $0x60] sm:$0xff]
    %v102 = vld [vmem:[#allocation8 + $0x68] sm:$0xf]
    %v103 = vld [vmem:[#allocation8 + $0x6c] sm:$0xff]
    %v104 = vld [vmem:[#allocation8 + $0x74] sm:$0xf]
    %v105 = vld [vmem:[#allocation8 + $0x78] sm:$0xff]
    %v106 = vld [vmem:[#allocation8 + $0x80] sm:$0xf]
    %v107 = vld [vmem:[#allocation8 + $0x84] sm:$0xff]
    %v108 = vld [vmem:[#allocation8 + $0x8c] sm:$0xf]
    %v109 = vld [vmem:[#allocation8 + $0x90] sm:$0xff]
    %v110 = vld [vmem:[#allocation8 + $0x98] sm:$0xf]
    %v111 = vld [vmem:[#allocation8 + $0x9c] sm:$0xff]
    %v112 = vld [vmem:[#allocation8 + $0xa4] sm:$0xf]
    %v113 = vld [vmem:[#allocation8 + $0xa8] sm:$0xff]
    %v114 = vld [vmem:[#allocation8 + $0xb0] sm:$0xf]
    %v115 = vld [vmem:[#allocation8 + $0xb4] sm:$0xff]
    %v116 = vld [vmem:[#allocation8 + $0xbc] sm:$0xf]
    %v117 = vld [vmem:[%s4] sm:$0x7]
    %v119 = vlaneseq
    %v120 = vshrl.u32 %v119, 7
    %v121 = vsub.s32 0, %v120
    %v122 = vrot.slane %v117, %v121
    %v123 = vlaneseq
    %v124 = vshrl.u32 %v123, 7
    %v125 = vsub.s32 1, %v124
    %v126 = vrot.slane %v117, %v125
    %v127 = vlaneseq
    %v128 = vshrl.u32 %v127, 7
    %v129 = vsub.s32 2, %v128
    %v130 = vrot.slane %v117, %v129
    %v166 = vunpack.c.l.b16 %v85
    %v167 = vunpack.c.h.b16 %v85
    %v168 = vunpack.c.l.b16 %v86
    %v169 = vunpack.c.l.b16 %v87
    %v170 = vunpack.c.h.b16 %v87
    %v171 = vunpack.c.l.b16 %v88
    %v172 = vunpack.c.l.b16 %v89
    %v173 = vunpack.c.h.b16 %v89
    %v174 = vunpack.c.l.b16 %v90
    %v175 = vunpack.c.l.b16 %v91
    %v176 = vunpack.c.h.b16 %v91
    %v177 = vunpack.c.l.b16 %v92
    %v178 = vunpack.c.l.b16 %v93
    %v179 = vunpack.c.h.b16 %v93
    %v180 = vunpack.c.l.b16 %v94
    %v181 = vunpack.c.l.b16 %v95
    %v182 = vunpack.c.h.b16 %v95
    %v183 = vunpack.c.l.b16 %v96
    %v184 = vunpack.c.l.b16 %v97
    %v185 = vunpack.c.h.b16 %v97
    %v186 = vunpack.c.l.b16 %v98
    %v187 = vunpack.c.l.b16 %v99
    %v188 = vunpack.c.h.b16 %v99
    %v189 = vunpack.c.l.b16 %v100
    %v190 = vunpack.c.l.b16 %v101
    %v191 = vunpack.c.h.b16 %v101
    %v192 = vunpack.c.l.b16 %v102
    %v193 = vunpack.c.l.b16 %v103
    %v194 = vunpack.c.h.b16 %v103
    %v195 = vunpack.c.l.b16 %v104
    %v196 = vunpack.c.l.b16 %v105
    %v197 = vunpack.c.h.b16 %v105
    %v198 = vunpack.c.l.b16 %v106
    %v199 = vunpack.c.l.b16 %v107
    %v200 = vunpack.c.h.b16 %v107
    %v201 = vunpack.c.l.b16 %v108
    %v202 = vunpack.c.l.b16 %v109
    %v203 = vunpack.c.h.b16 %v109
    %v204 = vunpack.c.l.b16 %v110
    %v205 = vunpack.c.l.b16 %v111
    %v206 = vunpack.c.h.b16 %v111
    %v207 = vunpack.c.l.b16 %v112
    %v208 = vunpack.c.l.b16 %v113
    %v209 = vunpack.c.h.b16 %v113
    %v210 = vunpack.c.l.b16 %v114
    %v211 = vunpack.c.l.b16 %v115
    %v212 = vunpack.c.h.b16 %v115
    %v213 = vunpack.c.l.b16 %v116
    %v214 = vpack.c.b16 %v169, %v166
    %v215 = vpack.c.b16 %v170, %v167
    %v216 = vpack.c.b16 %v171, %v168
    %v217 = vpack.c.b16 %v175, %v172
    %v218 = vpack.c.b16 %v176, %v173
    %v219 = vpack.c.b16 %v177, %v174
    %v220 = vpack.c.b16 %v181, %v178
    %v221 = vpack.c.b16 %v182, %v179
    %v222 = vpack.c.b16 %v183, %v180
    %v223 = vpack.c.b16 %v187, %v184
    %v224 = vpack.c.b16 %v188, %v185
    %v225 = vpack.c.b16 %v189, %v186
    %v226 = vpack.c.b16 %v193, %v190
    %v227 = vpack.c.b16 %v194, %v191
    %v228 = vpack.c.b16 %v195, %v192
    %v229 = vpack.c.b16 %v199, %v196
    %v230 = vpack.c.b16 %v200, %v197
    %v231 = vpack.c.b16 %v201, %v198
    %v232 = vpack.c.b16 %v205, %v202
    %v233 = vpack.c.b16 %v206, %v203
    %v234 = vpack.c.b16 %v207, %v204
    %v235 = vpack.c.b16 %v211, %v208
    %v236 = vpack.c.b16 %v212, %v209
    %v237 = vpack.c.b16 %v213, %v210
    %262 = vmatprep.subr.bf16.mxu0 %v215
    %263 = vmatpush1.bf16.msra.mxu0 %v214
    %264 = vmatprep.subr.bf16.mxu0 %v218
    %265 = vmatpush1.bf16.msra.mxu0 %v217
    %266 = vmatprep.subr.bf16.mxu0 %v221
    %267 = vmatpush1.bf16.msra.mxu0 %v220
    %268 = vmatprep.subr.bf16.mxu0 %v224
    %269 = vmatpush1.bf16.msra.mxu0 %v223
    %270 = vmatprep.subr.bf16.mxu0 %v227
    %271 = vmatpush1.bf16.msra.mxu0 %v226
    %272 = vmatprep.subr.bf16.mxu0 %v230
    %273 = vmatpush1.bf16.msra.mxu0 %v229
    %274 = vmatprep.subr.bf16.mxu0 %v233
    %275 = vmatpush1.bf16.msra.mxu0 %v232
    %276 = vmatprep.subr.bf16.mxu0 %v236
    %277 = vmatpush1.bf16.msra.mxu0 %v235
    %278 = vmatprep.subr.bf16.mxu0 0
    %279 = vmatpush1.bf16.msra.mxu0 0
    %280 = vmatprep.subr.bf16.mxu0 0
    %281 = vmatpush1.bf16.msra.mxu0 0
    %282 = vmatprep.subr.bf16.mxu0 0
    %283 = vmatpush1.bf16.msra.mxu0 0
    %284 = vmatprep.subr.bf16.mxu0 0
    %285 = vmatpush1.bf16.msra.mxu0 0
    %286 = vmatprep.subr.bf16.mxu0 0
    %287 = vmatpush1.bf16.msra.mxu0 0
    %288 = vmatprep.subr.bf16.mxu0 0
    %289 = vmatpush1.bf16.msra.mxu0 0
    %290 = vmatprep.subr.bf16.mxu0 0
    %291 = vmatpush1.bf16.msra.mxu0 0
    %292 = vmatprep.subr.bf16.mxu0 0
    %293 = vmatpush1.bf16.msra.mxu0 0
    %294 = vmatprep.mubr.bf16.mxu0 0
    %295 = vmatmul.mubr.bf16.gmra.mrb[0].mxu0 %v84
    %v296 = vpop.f32.mrb[0].mxu0
    %v297 = vadd.f32 %v122, %v296
    %v298 = vpop.f32.mrb[0].mxu0
    %v299 = vadd.f32 %v126, %v298
    %v300 = vpop.f32.mrb[0].mxu0
    %v301 = vpop.f32.mrb[0].mxu0
    %302 = vdwg.mxu0
    %303 = vmatprep.subr.bf16.mxu0 0
    %304 = vmatpush1.bf16.msra.mxu0 %v216
    %305 = vmatprep.subr.bf16.mxu0 0
    %306 = vmatpush1.bf16.msra.mxu0 %v219
    %307 = vmatprep.subr.bf16.mxu0 0
    %308 = vmatpush1.bf16.msra.mxu0 %v222
    %309 = vmatprep.subr.bf16.mxu0 0
    %310 = vmatpush1.bf16.msra.mxu0 %v225
    %311 = vmatprep.subr.bf16.mxu0 0
    %312 = vmatpush1.bf16.msra.mxu0 %v228
    %313 = vmatprep.subr.bf16.mxu0 0
    %314 = vmatpush1.bf16.msra.mxu0 %v231
    %315 = vmatprep.subr.bf16.mxu0 0
    %316 = vmatpush1.bf16.msra.mxu0 %v234
    %317 = vmatprep.subr.bf16.mxu0 0
    %318 = vmatpush1.bf16.msra.mxu0 %v237
    %319 = vmatprep.subr.bf16.mxu0 0
    %320 = vmatpush1.bf16.msra.mxu0 0
    %321 = vmatprep.subr.bf16.mxu0 0
    %322 = vmatpush1.bf16.msra.mxu0 0
    %323 = vmatprep.subr.bf16.mxu0 0
    %324 = vmatpush1.bf16.msra.mxu0 0
    %325 = vmatprep.subr.bf16.mxu0 0
    %326 = vmatpush1.bf16.msra.mxu0 0
    %327 = vmatprep.subr.bf16.mxu0 0
    %328 = vmatpush1.bf16.msra.mxu0 0
    %329 = vmatprep.subr.bf16.mxu0 0
    %330 = vmatpush1.bf16.msra.mxu0 0
    %331 = vmatprep.subr.bf16.mxu0 0
    %332 = vmatpush1.bf16.msra.mxu0 0
    %333 = vmatprep.subr.bf16.mxu0 0
    %334 = vmatpush1.bf16.msra.mxu0 0
    %335 = vmatprep.mubr.bf16.mxu0 0
    %336 = vmatmul.mubr.bf16.gmra.mrb[0].mxu0 %v84
    %v337 = vpop.f32.mrb[0].mxu0
    %v338 = vadd.f32 %v130, %v337
    %v339 = vpop.f32.mrb[0].mxu0
    %v340 = vpop.f32.mrb[0].mxu0
    %v341 = vpop.f32.mrb[0].mxu0
    %342 = vdwg.mxu0
    %v343 = vadd.f32 %v80, %v297
    %v344 = vadd.f32 %v81, %v299
    %v345 = vxor.u32 %v343, 2147483648
    %v346 = vxor.u32 %v344, 2147483648
    %v347 = vmul.f32 %v345, 1.442695
    %v348 = vpow.pop %v347
    %v349 = vmul.f32 %v346, 1.442695
    %v350 = vpow.pop %v349
    %v351 = vadd.f32 %v348, 1.0
    %v352 = vadd.f32 %v350, 1.0
    %v353 = vrcp.pop %v351
    %v354 = vmul.f32 1.0, %v353
    %v355 = vrcp.pop %v352
    %v356 = vmul.f32 1.0, %v355
    %v357 = vmul.f32 %v354, %v338
    %v358 = vadd.f32 %v82, %v357
    %v359 = vtanh.pop %v358
    %v360 = vsub.f32 1.0, %v356
    %v361 = vmul.f32 %v360, %v359
    %v362 = vmul.f32 %v356, %v83
    %v363 = vadd.f32 %v361, %v362
    %364 = vst [vmem:[#allocation2] sm:$0xff] %v363
    %365 = vst [vmem:[#allocation11] sm:$0xff] %v363
    %s366 = scalar_lea.vmem [#allocation3], 24
    %v367 = vld [vmem:[%s366] sm:$0xff]
    %v368 = vld [vmem:[%s366 + $0x8] sm:$0xff]
    %v369 = vld [vmem:[%s366 + $0x10] sm:$0xff]
    %v370 = vld [vmem:[#allocation2] sm:$0xff]
    %v371 = vpack.c.bf16 %v370, %v370
    %v372 = vld [vmem:[#allocation8] sm:$0xff]
    %v373 = vld [vmem:[#allocation8 + $0x8] sm:$0xf]
    %v374 = vld [vmem:[#allocation8 + $0xc] sm:$0xff]
    %v375 = vld [vmem:[#allocation8 + $0x14] sm:$0xf]
    %v376 = vld [vmem:[#allocation8 + $0x18] sm:$0xff]
    %v377 = vld [vmem:[#allocation8 + $0x20] sm:$0xf]
    %v378 = vld [vmem:[#allocation8 + $0x24] sm:$0xff]
    %v379 = vld [vmem:[#allocation8 + $0x2c] sm:$0xf]
    %v380 = vld [vmem:[#allocation8 + $0x30] sm:$0xff]
    %v381 = vld [vmem:[#allocation8 + $0x38] sm:$0xf]
    %v382 = vld [vmem:[#allocation8 + $0x3c] sm:$0xff]
    %v383 = vld [vmem:[#allocation8 + $0x44] sm:$0xf]
    %v384 = vld [vmem:[#allocation8 + $0x48] sm:$0xff]
    %v385 = vld [vmem:[#allocation8 + $0x50] sm:$0xf]
    %v386 = vld [vmem:[#allocation8 + $0x54] sm:$0xff]
    %v387 = vld [vmem:[#allocation8 + $0x5c] sm:$0xf]
    %v388 = vld [vmem:[#allocation8 + $0x60] sm:$0xff]
    %v389 = vld [vmem:[#allocation8 + $0x68] sm:$0xf]
    %v390 = vld [vmem:[#allocation8 + $0x6c] sm:$0xff]
    %v391 = vld [vmem:[#allocation8 + $0x74] sm:$0xf]
    %v392 = vld [vmem:[#allocation8 + $0x78] sm:$0xff]
    %v393 = vld [vmem:[#allocation8 + $0x80] sm:$0xf]
    %v394 = vld [vmem:[#allocation8 + $0x84] sm:$0xff]
    %v395 = vld [vmem:[#allocation8 + $0x8c] sm:$0xf]
    %v396 = vld [vmem:[#allocation8 + $0x90] sm:$0xff]
    %v397 = vld [vmem:[#allocation8 + $0x98] sm:$0xf]
    %v398 = vld [vmem:[#allocation8 + $0x9c] sm:$0xff]
    %v399 = vld [vmem:[#allocation8 + $0xa4] sm:$0xf]
    %v400 = vld [vmem:[#allocation8 + $0xa8] sm:$0xff]
    %v401 = vld [vmem:[#allocation8 + $0xb0] sm:$0xf]
    %v402 = vld [vmem:[#allocation8 + $0xb4] sm:$0xff]
    %v403 = vld [vmem:[#allocation8 + $0xbc] sm:$0xf]
    %v404 = vld [vmem:[%s4] sm:$0x7]
    %v406 = vlaneseq
    %v407 = vshrl.u32 %v406, 7
    %v408 = vsub.s32 0, %v407
    %v409 = vrot.slane %v404, %v408
    %v410 = vlaneseq
    %v411 = vshrl.u32 %v410, 7
    %v412 = vsub.s32 1, %v411
    %v413 = vrot.slane %v404, %v412
    %v414 = vlaneseq
    %v415 = vshrl.u32 %v414, 7
    %v416 = vsub.s32 2, %v415
    %v417 = vrot.slane %v404, %v416
    %v453 = vunpack.c.l.b16 %v372
    %v454 = vunpack.c.h.b16 %v372
    %v455 = vunpack.c.l.b16 %v373
    %v456 = vunpack.c.l.b16 %v374
    %v457 = vunpack.c.h.b16 %v374
    %v458 = vunpack.c.l.b16 %v375
    %v459 = vunpack.c.l.b16 %v376
    %v460 = vunpack.c.h.b16 %v376
    %v461 = vunpack.c.l.b16 %v377
    %v462 = vunpack.c.l.b16 %v378
    %v463 = vunpack.c.h.b16 %v378
    %v464 = vunpack.c.l.b16 %v379
    %v465 = vunpack.c.l.b16 %v380
    %v466 = vunpack.c.h.b16 %v380
    %v467 = vunpack.c.l.b16 %v381
    %v468 = vunpack.c.l.b16 %v382
    %v469 = vunpack.c.h.b16 %v382
    %v470 = vunpack.c.l.b16 %v383
    %v471 = vunpack.c.l.b16 %v384
    %v472 = vunpack.c.h.b16 %v384
    %v473 = vunpack.c.l.b16 %v385
    %v474 = vunpack.c.l.b16 %v386
    %v475 = vunpack.c.h.b16 %v386
    %v476 = vunpack.c.l.b16 %v387
    %v477 = vunpack.c.l.b16 %v388
    %v478 = vunpack.c.h.b16 %v388
    %v479 = vunpack.c.l.b16 %v389
    %v480 = vunpack.c.l.b16 %v390
    %v481 = vunpack.c.h.b16 %v390
    %v482 = vunpack.c.l.b16 %v391
    %v483 = vunpack.c.l.b16 %v392
    %v484 = vunpack.c.h.b16 %v392
    %v485 = vunpack.c.l.b16 %v393
    %v486 = vunpack.c.l.b16 %v394
    %v487 = vunpack.c.h.b16 %v394
    %v488 = vunpack.c.l.b16 %v395
    %v489 = vunpack.c.l.b16 %v396
    %v490 = vunpack.c.h.b16 %v396
    %v491 = vunpack.c.l.b16 %v397
    %v492 = vunpack.c.l.b16 %v398
    %v493 = vunpack.c.h.b16 %v398
    %v494 = vunpack.c.l.b16 %v399
    %v495 = vunpack.c.l.b16 %v400
    %v496 = vunpack.c.h.b16 %v400
    %v497 = vunpack.c.l.b16 %v401
    %v498 = vunpack.c.l.b16 %v402
    %v499 = vunpack.c.h.b16 %v402
    %v500 = vunpack.c.l.b16 %v403
    %v501 = vpack.c.b16 %v456, %v453
    %v502 = vpack.c.b16 %v457, %v454
    %v503 = vpack.c.b16 %v458, %v455
    %v504 = vpack.c.b16 %v462, %v459
    %v505 = vpack.c.b16 %v463, %v460
    %v506 = vpack.c.b16 %v464, %v461
    %v507 = vpack.c.b16 %v468, %v465
    %v508 = vpack.c.b16 %v469, %v466
    %v509 = vpack.c.b16 %v470, %v467
    %v510 = vpack.c.b16 %v474, %v471
    %v511 = vpack.c.b16 %v475, %v472
    %v512 = vpack.c.b16 %v476, %v473
    %v513 = vpack.c.b16 %v480, %v477
    %v514 = vpack.c.b16 %v481, %v478
    %v515 = vpack.c.b16 %v482, %v479
    %v516 = vpack.c.b16 %v486, %v483
    %v517 = vpack.c.b16 %v487, %v484
    %v518 = vpack.c.b16 %v488, %v485
    %v519 = vpack.c.b16 %v492, %v489
    %v520 = vpack.c.b16 %v493, %v490
    %v521 = vpack.c.b16 %v494, %v491
    %v522 = vpack.c.b16 %v498, %v495
    %v523 = vpack.c.b16 %v499, %v496
    %v524 = vpack.c.b16 %v500, %v497
    %549 = vmatprep.subr.bf16.mxu0 %v502
    %550 = vmatpush1.bf16.msra.mxu0 %v501
    %551 = vmatprep.subr.bf16.mxu0 %v505
    %552 = vmatpush1.bf16.msra.mxu0 %v504
    %553 = vmatprep.subr.bf16.mxu0 %v508
    %554 = vmatpush1.bf16.msra.mxu0 %v507
    %555 = vmatprep.subr.bf16.mxu0 %v511
    %556 = vmatpush1.bf16.msra.mxu0 %v510
    %557 = vmatprep.subr.bf16.mxu0 %v514
    %558 = vmatpush1.bf16.msra.mxu0 %v513
    %559 = vmatprep.subr.bf16.mxu0 %v517
    %560 = vmatpush1.bf16.msra.mxu0 %v516
    %561 = vmatprep.subr.bf16.mxu0 %v520
    %562 = vmatpush1.bf16.msra.mxu0 %v519
    %563 = vmatprep.subr.bf16.mxu0 %v523
    %564 = vmatpush1.bf16.msra.mxu0 %v522
    %565 = vmatprep.subr.bf16.mxu0 0
    %566 = vmatpush1.bf16.msra.mxu0 0
    %567 = vmatprep.subr.bf16.mxu0 0
    %568 = vmatpush1.bf16.msra.mxu0 0
    %569 = vmatprep.subr.bf16.mxu0 0
    %570 = vmatpush1.bf16.msra.mxu0 0
    %571 = vmatprep.subr.bf16.mxu0 0
    %572 = vmatpush1.bf16.msra.mxu0 0
    %573 = vmatprep.subr.bf16.mxu0 0
    %574 = vmatpush1.bf16.msra.mxu0 0
    %575 = vmatprep.subr.bf16.mxu0 0
    %576 = vmatpush1.bf16.msra.mxu0 0
    %577 = vmatprep.subr.bf16.mxu0 0
    %578 = vmatpush1.bf16.msra.mxu0 0
    %579 = vmatprep.subr.bf16.mxu0 0
    %580 = vmatpush1.bf16.msra.mxu0 0
    %581 = vmatprep.mubr.bf16.mxu0 0
    %582 = vmatmul.mubr.bf16.gmra.mrb[0].mxu0 %v371
    %v583 = vpop.f32.mrb[0].mxu0
    %v584 = vadd.f32 %v409, %v583
    %v585 = vpop.f32.mrb[0].mxu0
    %v586 = vadd.f32 %v413, %v585
    %v587 = vpop.f32.mrb[0].mxu0
    %v588 = vpop.f32.mrb[0].mxu0
    %589 = vdwg.mxu0
    %590 = vmatprep.subr.bf16.mxu0 0
    %591 = vmatpush1.bf16.msra.mxu0 %v503
    %592 = vmatprep.subr.bf16.mxu0 0
    %593 = vmatpush1.bf16.msra.mxu0 %v506
    %594 = vmatprep.subr.bf16.mxu0 0
    %595 = vmatpush1.bf16.msra.mxu0 %v509
    %596 = vmatprep.subr.bf16.mxu0 0
    %597 = vmatpush1.bf16.msra.mxu0 %v512
    %598 = vmatprep.subr.bf16.mxu0 0
    %599 = vmatpush1.bf16.msra.mxu0 %v515
    %600 = vmatprep.subr.bf16.mxu0 0
    %601 = vmatpush1.bf16.msra.mxu0 %v518
    %602 = vmatprep.subr.bf16.mxu0 0
    %603 = vmatpush1.bf16.msra.mxu0 %v521
    %604 = vmatprep.subr.bf16.mxu0 0
    %605 = vmatpush1.bf16.msra.mxu0 %v524
    %606 = vmatprep.subr.bf16.mxu0 0
    %607 = vmatpush1.bf16.msra.mxu0 0
    %608 = vmatprep.subr.bf16.mxu0 0
    %609 = vmatpush1.bf16.msra.mxu0 0
    %610 = vmatprep.subr.bf16.mxu0 0
    %611 = vmatpush1.bf16.msra.mxu0 0
    %612 = vmatprep.subr.bf16.mxu0 0
    %613 = vmatpush1.bf16.msra.mxu0 0
    %614 = vmatprep.subr.bf16.mxu0 0
    %615 = vmatpush1.bf16.msra.mxu0 0
    %616 = vmatprep.subr.bf16.mxu0 0
    %617 = vmatpush1.bf16.msra.mxu0 0
    %618 = vmatprep.subr.bf16.mxu0 0
    %619 = vmatpush1.bf16.msra.mxu0 0
    %620 = vmatprep.subr.bf16.mxu0 0
    %621 = vmatpush1.bf16.msra.mxu0 0
    %622 = vmatprep.mubr.bf16.mxu0 0
    %623 = vmatmul.mubr.bf16.gmra.mrb[0].mxu0 %v371
    %v624 = vpop.f32.mrb[0].mxu0
    %v625 = vadd.f32 %v417, %v624
    %v626 = vpop.f32.mrb[0].mxu0
    %v627 = vpop.f32.mrb[0].mxu0
    %v628 = vpop.f32.mrb[0].mxu0
    %629 = vdwg.mxu0
    %v630 = vadd.f32 %v367, %v584
    %v631 = vadd.f32 %v368, %v586
    %v632 = vxor.u32 %v630, 2147483648
    %v633 = vxor.u32 %v631, 2147483648
    %v634 = vmul.f32 %v632, 1.442695
    %v635 = vpow.pop %v634
    %v636 = vmul.f32 %v633, 1.442695
    %v637 = vpow.pop %v636
    %v638 = vadd.f32 %v635, 1.0
    %v639 = vadd.f32 %v637, 1.0
    %v640 = vrcp.pop %v638
    %v641 = vmul.f32 1.0, %v640
    %v642 = vrcp.pop %v639
    %v643 = vmul.f32 1.0, %v642
    %v644 = vmul.f32 %v641, %v625
    %v645 = vadd.f32 %v369, %v644
    %v646 = vtanh.pop %v645
    %v647 = vsub.f32 1.0, %v643
    %v648 = vmul.f32 %v647, %v646
    %v649 = vmul.f32 %v643, %v370
    %v650 = vadd.f32 %v648, %v649
    %651 = vst [vmem:[#allocation2] sm:$0xff] %v650
    %s652 = scalar_lea.vmem [#allocation11], 8
    %653 = vst [vmem:[%s652] sm:$0xff] %v650
    %s654 = scalar_lea.vmem [#allocation3], 48
    %v655 = vld [vmem:[%s654] sm:$0xff]
    %v656 = vld [vmem:[%s654 + $0x8] sm:$0xff]
    %v657 = vld [vmem:[%s654 + $0x10] sm:$0xff]
    %v658 = vld [vmem:[#allocation2] sm:$0xff]
    %v659 = vpack.c.bf16 %v658, %v658
    %v660 = vld [vmem:[#allocation8] sm:$0xff]
    %v661 = vld [vmem:[#allocation8 + $0x8] sm:$0xf]
    %v662 = vld [vmem:[#allocation8 + $0xc] sm:$0xff]
    %v663 = vld [vmem:[#allocation8 + $0x14] sm:$0xf]
    %v664 = vld [vmem:[#allocation8 + $0x18] sm:$0xff]
    %v665 = vld [vmem:[#allocation8 + $0x20] sm:$0xf]
    %v666 = vld [vmem:[#allocation8 + $0x24] sm:$0xff]
    %v667 = vld [vmem:[#allocation8 + $0x2c] sm:$0xf]
    %v668 = vld [vmem:[#allocation8 + $0x30] sm:$0xff]
    %v669 = vld [vmem:[#allocation8 + $0x38] sm:$0xf]
    %v670 = vld [vmem:[#allocation8 + $0x3c] sm:$0xff]
    %v671 = vld [vmem:[#allocation8 + $0x44] sm:$0xf]
    %v672 = vld [vmem:[#allocation8 + $0x48] sm:$0xff]
    %v673 = vld [vmem:[#allocation8 + $0x50] sm:$0xf]
    %v674 = vld [vmem:[#allocation8 + $0x54] sm:$0xff]
    %v675 = vld [vmem:[#allocation8 + $0x5c] sm:$0xf]
    %v676 = vld [vmem:[#allocation8 + $0x60] sm:$0xff]
    %v677 = vld [vmem:[#allocation8 + $0x68] sm:$0xf]
    %v678 = vld [vmem:[#allocation8 + $0x6c] sm:$0xff]
    %v679 = vld [vmem:[#allocation8 + $0x74] sm:$0xf]
    %v680 = vld [vmem:[#allocation8 + $0x78] sm:$0xff]
    %v681 = vld [vmem:[#allocation8 + $0x80] sm:$0xf]
    %v682 = vld [vmem:[#allocation8 + $0x84] sm:$0xff]
    %v683 = vld [vmem:[#allocation8 + $0x8c] sm:$0xf]
    %v684 = vld [vmem:[#allocation8 + $0x90] sm:$0xff]
    %v685 = vld [vmem:[#allocation8 + $0x98] sm:$0xf]
    %v686 = vld [vmem:[#allocation8 + $0x9c] sm:$0xff]
    %v687 = vld [vmem:[#allocation8 + $0xa4] sm:$0xf]
    %v688 = vld [vmem:[#allocation8 + $0xa8] sm:$0xff]
    %v689 = vld [vmem:[#allocation8 + $0xb0] sm:$0xf]
    %v690 = vld [vmem:[#allocation8 + $0xb4] sm:$0xff]
    %v691 = vld [vmem:[#allocation8 + $0xbc] sm:$0xf]
    %v692 = vld [vmem:[%s4] sm:$0x7]
    %v694 = vlaneseq
    %v695 = vshrl.u32 %v694, 7
    %v696 = vsub.s32 0, %v695
    %v697 = vrot.slane %v692, %v696
    %v698 = vlaneseq
    %v699 = vshrl.u32 %v698, 7
    %v700 = vsub.s32 1, %v699
    %v701 = vrot.slane %v692, %v700
    %v702 = vlaneseq
    %v703 = vshrl.u32 %v702, 7
    %v704 = vsub.s32 2, %v703
    %v705 = vrot.slane %v692, %v704
    %v741 = vunpack.c.l.b16 %v660
    %v742 = vunpack.c.h.b16 %v660
    %v743 = vunpack.c.l.b16 %v661
    %v744 = vunpack.c.l.b16 %v662
    %v745 = vunpack.c.h.b16 %v662
    %v746 = vunpack.c.l.b16 %v663
    %v747 = vunpack.c.l.b16 %v664
    %v748 = vunpack.c.h.b16 %v664
    %v749 = vunpack.c.l.b16 %v665
    %v750 = vunpack.c.l.b16 %v666
    %v751 = vunpack.c.h.b16 %v666
    %v752 = vunpack.c.l.b16 %v667
    %v753 = vunpack.c.l.b16 %v668
    %v754 = vunpack.c.h.b16 %v668
    %v755 = vunpack.c.l.b16 %v669
    %v756 = vunpack.c.l.b16 %v670
    %v757 = vunpack.c.h.b16 %v670
    %v758 = vunpack.c.l.b16 %v671
    %v759 = vunpack.c.l.b16 %v672
    %v760 = vunpack.c.h.b16 %v672
    %v761 = vunpack.c.l.b16 %v673
    %v762 = vunpack.c.l.b16 %v674
    %v763 = vunpack.c.h.b16 %v674
    %v764 = vunpack.c.l.b16 %v675
    %v765 = vunpack.c.l.b16 %v676
    %v766 = vunpack.c.h.b16 %v676
    %v767 = vunpack.c.l.b16 %v677
    %v768 = vunpack.c.l.b16 %v678
    %v769 = vunpack.c.h.b16 %v678
    %v770 = vunpack.c.l.b16 %v679
    %v771 = vunpack.c.l.b16 %v680
    %v772 = vunpack.c.h.b16 %v680
    %v773 = vunpack.c.l.b16 %v681
    %v774 = vunpack.c.l.b16 %v682
    %v775 = vunpack.c.h.b16 %v682
    %v776 = vunpack.c.l.b16 %v683
    %v777 = vunpack.c.l.b16 %v684
    %v778 = vunpack.c.h.b16 %v684
    %v779 = vunpack.c.l.b16 %v685
    %v780 = vunpack.c.l.b16 %v686
    %v781 = vunpack.c.h.b16 %v686
    %v782 = vunpack.c.l.b16 %v687
    %v783 = vunpack.c.l.b16 %v688
    %v784 = vunpack.c.h.b16 %v688
    %v785 = vunpack.c.l.b16 %v689
    %v786 = vunpack.c.l.b16 %v690
    %v787 = vunpack.c.h.b16 %v690
    %v788 = vunpack.c.l.b16 %v691
    %v789 = vpack.c.b16 %v744, %v741
    %v790 = vpack.c.b16 %v745, %v742
    %v791 = vpack.c.b16 %v746, %v743
    %v792 = vpack.c.b16 %v750, %v747
    %v793 = vpack.c.b16 %v751, %v748
    %v794 = vpack.c.b16 %v752, %v749
    %v795 = vpack.c.b16 %v756, %v753
    %v796 = vpack.c.b16 %v757, %v754
    %v797 = vpack.c.b16 %v758, %v755
    %v798 = vpack.c.b16 %v762, %v759
    %v799 = vpack.c.b16 %v763, %v760
    %v800 = vpack.c.b16 %v764, %v761
    %v801 = vpack.c.b16 %v768, %v765
    %v802 = vpack.c.b16 %v769, %v766
    %v803 = vpack.c.b16 %v770, %v767
    %v804 = vpack.c.b16 %v774, %v771
    %v805 = vpack.c.b16 %v775, %v772
    %v806 = vpack.c.b16 %v776, %v773
    %v807 = vpack.c.b16 %v780, %v777
    %v808 = vpack.c.b16 %v781, %v778
    %v809 = vpack.c.b16 %v782, %v779
    %v810 = vpack.c.b16 %v786, %v783
    %v811 = vpack.c.b16 %v787, %v784
    %v812 = vpack.c.b16 %v788, %v785
    %837 = vmatprep.subr.bf16.mxu0 %v790
    %838 = vmatpush1.bf16.msra.mxu0 %v789
    %839 = vmatprep.subr.bf16.mxu0 %v793
    %840 = vmatpush1.bf16.msra.mxu0 %v792
    %841 = vmatprep.subr.bf16.mxu0 %v796
    %842 = vmatpush1.bf16.msra.mxu0 %v795
    %843 = vmatprep.subr.bf16.mxu0 %v799
    %844 = vmatpush1.bf16.msra.mxu0 %v798
    %845 = vmatprep.subr.bf16.mxu0 %v802
    %846 = vmatpush1.bf16.msra.mxu0 %v801
    %847 = vmatprep.subr.bf16.mxu0 %v805
    %848 = vmatpush1.bf16.msra.mxu0 %v804
    %849 = vmatprep.subr.bf16.mxu0 %v808
    %850 = vmatpush1.bf16.msra.mxu0 %v807
    %851 = vmatprep.subr.bf16.mxu0 %v811
    %852 = vmatpush1.bf16.msra.mxu0 %v810
    %853 = vmatprep.subr.bf16.mxu0 0
    %854 = vmatpush1.bf16.msra.mxu0 0
    %855 = vmatprep.subr.bf16.mxu0 0
    %856 = vmatpush1.bf16.msra.mxu0 0
    %857 = vmatprep.subr.bf16.mxu0 0
    %858 = vmatpush1.bf16.msra.mxu0 0
    %859 = vmatprep.subr.bf16.mxu0 0
    %860 = vmatpush1.bf16.msra.mxu0 0
    %861 = vmatprep.subr.bf16.mxu0 0
    %862 = vmatpush1.bf16.msra.mxu0 0
    %863 = vmatprep.subr.bf16.mxu0 0
    %864 = vmatpush1.bf16.msra.mxu0 0
    %865 = vmatprep.subr.bf16.mxu0 0
    %866 = vmatpush1.bf16.msra.mxu0 0
    %867 = vmatprep.subr.bf16.mxu0 0
    %868 = vmatpush1.bf16.msra.mxu0 0
    %869 = vmatprep.mubr.bf16.mxu0 0
    %870 = vmatmul.mubr.bf16.gmra.mrb[0].mxu0 %v659
    %v871 = vpop.f32.mrb[0].mxu0
    %v872 = vadd.f32 %v697, %v871
    %v873 = vpop.f32.mrb[0].mxu0
    %v874 = vadd.f32 %v701, %v873
    %v875 = vpop.f32.mrb[0].mxu0
    %v876 = vpop.f32.mrb[0].mxu0
    %877 = vdwg.mxu0
    %878 = vmatprep.subr.bf16.mxu0 0
    %879 = vmatpush1.bf16.msra.mxu0 %v791
    %880 = vmatprep.subr.bf16.mxu0 0
    %881 = vmatpush1.bf16.msra.mxu0 %v794
    %882 = vmatprep.subr.bf16.mxu0 0
    %883 = vmatpush1.bf16.msra.mxu0 %v797
    %884 = vmatprep.subr.bf16.mxu0 0
    %885 = vmatpush1.bf16.msra.mxu0 %v800
    %886 = vmatprep.subr.bf16.mxu0 0
    %887 = vmatpush1.bf16.msra.mxu0 %v803
    %888 = vmatprep.subr.bf16.mxu0 0
    %889 = vmatpush1.bf16.msra.mxu0 %v806
    %890 = vmatprep.subr.bf16.mxu0 0
    %891 = vmatpush1.bf16.msra.mxu0 %v809
    %892 = vmatprep.subr.bf16.mxu0 0
    %893 = vmatpush1.bf16.msra.mxu0 %v812
    %894 = vmatprep.subr.bf16.mxu0 0
    %895 = vmatpush1.bf16.msra.mxu0 0
    %896 = vmatprep.subr.bf16.mxu0 0
    %897 = vmatpush1.bf16.msra.mxu0 0
    %898 = vmatprep.subr.bf16.mxu0 0
    %899 = vmatpush1.bf16.msra.mxu0 0
    %900 = vmatprep.subr.bf16.mxu0 0
    %901 = vmatpush1.bf16.msra.mxu0 0
    %902 = vmatprep.subr.bf16.mxu0 0
    %903 = vmatpush1.bf16.msra.mxu0 0
    %904 = vmatprep.subr.bf16.mxu0 0
    %905 = vmatpush1.bf16.msra.mxu0 0
    %906 = vmatprep.subr.bf16.mxu0 0
    %907 = vmatpush1.bf16.msra.mxu0 0
    %908 = vmatprep.subr.bf16.mxu0 0
    %909 = vmatpush1.bf16.msra.mxu0 0
    %910 = vmatprep.mubr.bf16.mxu0 0
    %911 = vmatmul.mubr.bf16.gmra.mrb[0].mxu0 %v659
    %v912 = vpop.f32.mrb[0].mxu0
    %v913 = vadd.f32 %v705, %v912
    %v914 = vpop.f32.mrb[0].mxu0
    %v915 = vpop.f32.mrb[0].mxu0
    %v916 = vpop.f32.mrb[0].mxu0
    %917 = vdwg.mxu0
    %v918 = vadd.f32 %v655, %v872
    %v919 = vadd.f32 %v656, %v874
    %v920 = vxor.u32 %v918, 2147483648
    %v921 = vxor.u32 %v919, 2147483648
    %v922 = vmul.f32 %v920, 1.442695
    %v923 = vpow.pop %v922
    %v924 = vmul.f32 %v921, 1.442695
    %v925 = vpow.pop %v924
    %v926 = vadd.f32 %v923, 1.0
    %v927 = vadd.f32 %v925, 1.0
    %v928 = vrcp.pop %v926
    %v929 = vmul.f32 1.0, %v928
    %v930 = vrcp.pop %v927
    %v931 = vmul.f32 1.0, %v930
    %v932 = vmul.f32 %v929, %v913
    %v933 = vadd.f32 %v657, %v932
    %v934 = vtanh.pop %v933
    %v935 = vsub.f32 1.0, %v931
    %v936 = vmul.f32 %v935, %v934
    %v937 = vmul.f32 %v931, %v658
    %v938 = vadd.f32 %v936, %v937
    %939 = vst [vmem:[#allocation2] sm:$0xff] %v938
    %s940 = scalar_lea.vmem [#allocation11], 16
    %941 = vst [vmem:[%s940] sm:$0xff] %v938
    %s942 = scalar_lea.vmem [#allocation3], 72
    %v943 = vld [vmem:[%s942] sm:$0xff]
    %v944 = vld [vmem:[%s942 + $0x8] sm:$0xff]
    %v945 = vld [vmem:[%s942 + $0x10] sm:$0xff]
    %v946 = vld [vmem:[#allocation2] sm:$0xff]
    %v947 = vpack.c.bf16 %v946, %v946
    %v948 = vld [vmem:[#allocation8] sm:$0xff]
    %v949 = vld [vmem:[#allocation8 + $0x8] sm:$0xf]
    %v950 = vld [vmem:[#allocation8 + $0xc] sm:$0xff]
    %v951 = vld [vmem:[#allocation8 + $0x14] sm:$0xf]
    %v952 = vld [vmem:[#allocation8 + $0x18] sm:$0xff]
    %v953 = vld [vmem:[#allocation8 + $0x20] sm:$0xf]
    %v954 = vld [vmem:[#allocation8 + $0x24] sm:$0xff]
    %v955 = vld [vmem:[#allocation8 + $0x2c] sm:$0xf]
    %v956 = vld [vmem:[#allocation8 + $0x30] sm:$0xff]
    %v957 = vld [vmem:[#allocation8 + $0x38] sm:$0xf]
    %v958 = vld [vmem:[#allocation8 + $0x3c] sm:$0xff]
    %v959 = vld [vmem:[#allocation8 + $0x44] sm:$0xf]
    %v960 = vld [vmem:[#allocation8 + $0x48] sm:$0xff]
    %v961 = vld [vmem:[#allocation8 + $0x50] sm:$0xf]
    %v962 = vld [vmem:[#allocation8 + $0x54] sm:$0xff]
    %v963 = vld [vmem:[#allocation8 + $0x5c] sm:$0xf]
    %v964 = vld [vmem:[#allocation8 + $0x60] sm:$0xff]
    %v965 = vld [vmem:[#allocation8 + $0x68] sm:$0xf]
    %v966 = vld [vmem:[#allocation8 + $0x6c] sm:$0xff]
    %v967 = vld [vmem:[#allocation8 + $0x74] sm:$0xf]
    %v968 = vld [vmem:[#allocation8 + $0x78] sm:$0xff]
    %v969 = vld [vmem:[#allocation8 + $0x80] sm:$0xf]
    %v970 = vld [vmem:[#allocation8 + $0x84] sm:$0xff]
    %v971 = vld [vmem:[#allocation8 + $0x8c] sm:$0xf]
    %v972 = vld [vmem:[#allocation8 + $0x90] sm:$0xff]
    %v973 = vld [vmem:[#allocation8 + $0x98] sm:$0xf]
    %v974 = vld [vmem:[#allocation8 + $0x9c] sm:$0xff]
    %v975 = vld [vmem:[#allocation8 + $0xa4] sm:$0xf]
    %v976 = vld [vmem:[#allocation8 + $0xa8] sm:$0xff]
    %v977 = vld [vmem:[#allocation8 + $0xb0] sm:$0xf]
    %v978 = vld [vmem:[#allocation8 + $0xb4] sm:$0xff]
    %v979 = vld [vmem:[#allocation8 + $0xbc] sm:$0xf]
    %v980 = vld [vmem:[%s4] sm:$0x7]
    %v982 = vlaneseq
    %v983 = vshrl.u32 %v982, 7
    %v984 = vsub.s32 0, %v983
    %v985 = vrot.slane %v980, %v984
    %v986 = vlaneseq
    %v987 = vshrl.u32 %v986, 7
    %v988 = vsub.s32 1, %v987
    %v989 = vrot.slane %v980, %v988
    %v990 = vlaneseq
    %v991 = vshrl.u32 %v990, 7
    %v992 = vsub.s32 2, %v991
    %v993 = vrot.slane %v980, %v992
    %v1029 = vunpack.c.l.b16 %v948
    %v1030 = vunpack.c.h.b16 %v948
    %v1031 = vunpack.c.l.b16 %v949
    %v1032 = vunpack.c.l.b16 %v950
    %v1033 = vunpack.c.h.b16 %v950
    %v1034 = vunpack.c.l.b16 %v951
    %v1035 = vunpack.c.l.b16 %v952
    %v1036 = vunpack.c.h.b16 %v952
    %v1037 = vunpack.c.l.b16 %v953
    %v1038 = vunpack.c.l.b16 %v954
    %v1039 = vunpack.c.h.b16 %v954
    %v1040 = vunpack.c.l.b16 %v955
    %v1041 = vunpack.c.l.b16 %v956
    %v1042 = vunpack.c.h.b16 %v956
    %v1043 = vunpack.c.l.b16 %v957
    %v1044 = vunpack.c.l.b16 %v958
    %v1045 = vunpack.c.h.b16 %v958
    %v1046 = vunpack.c.l.b16 %v959
    %v1047 = vunpack.c.l.b16 %v960
    %v1048 = vunpack.c.h.b16 %v960
    %v1049 = vunpack.c.l.b16 %v961
    %v1050 = vunpack.c.l.b16 %v962
    %v1051 = vunpack.c.h.b16 %v962
    %v1052 = vunpack.c.l.b16 %v963
    %v1053 = vunpack.c.l.b16 %v964
    %v1054 = vunpack.c.h.b16 %v964
    %v1055 = vunpack.c.l.b16 %v965
    %v1056 = vunpack.c.l.b16 %v966
    %v1057 = vunpack.c.h.b16 %v966
    %v1058 = vunpack.c.l.b16 %v967
    %v1059 = vunpack.c.l.b16 %v968
    %v1060 = vunpack.c.h.b16 %v968
    %v1061 = vunpack.c.l.b16 %v969
    %v1062 = vunpack.c.l.b16 %v970
    %v1063 = vunpack.c.h.b16 %v970
    %v1064 = vunpack.c.l.b16 %v971
    %v1065 = vunpack.c.l.b16 %v972
    %v1066 = vunpack.c.h.b16 %v972
    %v1067 = vunpack.c.l.b16 %v973
    %v1068 = vunpack.c.l.b16 %v974
    %v1069 = vunpack.c.h.b16 %v974
    %v1070 = vunpack.c.l.b16 %v975
    %v1071 = vunpack.c.l.b16 %v976
    %v1072 = vunpack.c.h.b16 %v976
    %v1073 = vunpack.c.l.b16 %v977
    %v1074 = vunpack.c.l.b16 %v978
    %v1075 = vunpack.c.h.b16 %v978
    %v1076 = vunpack.c.l.b16 %v979
    %v1077 = vpack.c.b16 %v1032, %v1029
    %v1078 = vpack.c.b16 %v1033, %v1030
    %v1079 = vpack.c.b16 %v1034, %v1031
    %v1080 = vpack.c.b16 %v1038, %v1035
    %v1081 = vpack.c.b16 %v1039, %v1036
    %v1082 = vpack.c.b16 %v1040, %v1037
    %v1083 = vpack.c.b16 %v1044, %v1041
    %v1084 = vpack.c.b16 %v1045, %v1042
    %v1085 = vpack.c.b16 %v1046, %v1043
    %v1086 = vpack.c.b16 %v1050, %v1047
    %v1087 = vpack.c.b16 %v1051, %v1048
    %v1088 = vpack.c.b16 %v1052, %v1049
    %v1089 = vpack.c.b16 %v1056, %v1053
    %v1090 = vpack.c.b16 %v1057, %v1054
    %v1091 = vpack.c.b16 %v1058, %v1055
    %v1092 = vpack.c.b16 %v1062, %v1059
    %v1093 = vpack.c.b16 %v1063, %v1060
    %v1094 = vpack.c.b16 %v1064, %v1061
    %v1095 = vpack.c.b16 %v1068, %v1065
    %v1096 = vpack.c.b16 %v1069, %v1066
    %v1097 = vpack.c.b16 %v1070, %v1067
    %v1098 = vpack.c.b16 %v1074, %v1071
    %v1099 = vpack.c.b16 %v1075, %v1072
    %v1100 = vpack.c.b16 %v1076, %v1073
    %1125 = vmatprep.subr.bf16.mxu0 %v1078
    %1126 = vmatpush1.bf16.msra.mxu0 %v1077
    %1127 = vmatprep.subr.bf16.mxu0 %v1081
    %1128 = vmatpush1.bf16.msra.mxu0 %v1080
    %1129 = vmatprep.subr.bf16.mxu0 %v1084
    %1130 = vmatpush1.bf16.msra.mxu0 %v1083
    %1131 = vmatprep.subr.bf16.mxu0 %v1087
    %1132 = vmatpush1.bf16.msra.mxu0 %v1086
    %1133 = vmatprep.subr.bf16.mxu0 %v1090
    %1134 = vmatpush1.bf16.msra.mxu0 %v1089
    %1135 = vmatprep.subr.bf16.mxu0 %v1093
    %1136 = vmatpush1.bf16.msra.mxu0 %v1092
    %1137 = vmatprep.subr.bf16.mxu0 %v1096
    %1138 = vmatpush1.bf16.msra.mxu0 %v1095
    %1139 = vmatprep.subr.bf16.mxu0 %v1099
    %1140 = vmatpush1.bf16.msra.mxu0 %v1098
    %1141 = vmatprep.subr.bf16.mxu0 0
    %1142 = vmatpush1.bf16.msra.mxu0 0
    %1143 = vmatprep.subr.bf16.mxu0 0
    %1144 = vmatpush1.bf16.msra.mxu0 0
    %1145 = vmatprep.subr.bf16.mxu0 0
    %1146 = vmatpush1.bf16.msra.mxu0 0
    %1147 = vmatprep.subr.bf16.mxu0 0
    %1148 = vmatpush1.bf16.msra.mxu0 0
    %1149 = vmatprep.subr.bf16.mxu0 0
    %1150 = vmatpush1.bf16.msra.mxu0 0
    %1151 = vmatprep.subr.bf16.mxu0 0
    %1152 = vmatpush1.bf16.msra.mxu0 0
    %1153 = vmatprep.subr.bf16.mxu0 0
    %1154 = vmatpush1.bf16.msra.mxu0 0
    %1155 = vmatprep.subr.bf16.mxu0 0
    %1156 = vmatpush1.bf16.msra.mxu0 0
    %1157 = vmatprep.mubr.bf16.mxu0 0
    %1158 = vmatmul.mubr.bf16.gmra.mrb[0].mxu0 %v947
    %v1159 = vpop.f32.mrb[0].mxu0
    %v1160 = vadd.f32 %v985, %v1159
    %v1161 = vpop.f32.mrb[0].mxu0
    %v1162 = vadd.f32 %v989, %v1161
    %v1163 = vpop.f32.mrb[0].mxu0
    %v1164 = vpop.f32.mrb[0].mxu0
    %1165 = vdwg.mxu0
    %1166 = vmatprep.subr.bf16.mxu0 0
    %1167 = vmatpush1.bf16.msra.mxu0 %v1079
    %1168 = vmatprep.subr.bf16.mxu0 0
    %1169 = vmatpush1.bf16.msra.mxu0 %v1082
    %1170 = vmatprep.subr.bf16.mxu0 0
    %1171 = vmatpush1.bf16.msra.mxu0 %v1085
    %1172 = vmatprep.subr.bf16.mxu0 0
    %1173 = vmatpush1.bf16.msra.mxu0 %v1088
    %1174 = vmatprep.subr.bf16.mxu0 0
    %1175 = vmatpush1.bf16.msra.mxu0 %v1091
    %1176 = vmatprep.subr.bf16.mxu0 0
    %1177 = vmatpush1.bf16.msra.mxu0 %v1094
    %1178 = vmatprep.subr.bf16.mxu0 0
    %1179 = vmatpush1.bf16.msra.mxu0 %v1097
    %1180 = vmatprep.subr.bf16.mxu0 0
    %1181 = vmatpush1.bf16.msra.mxu0 %v1100
    %1182 = vmatprep.subr.bf16.mxu0 0
    %1183 = vmatpush1.bf16.msra.mxu0 0
    %1184 = vmatprep.subr.bf16.mxu0 0
    %1185 = vmatpush1.bf16.msra.mxu0 0
    %1186 = vmatprep.subr.bf16.mxu0 0
    %1187 = vmatpush1.bf16.msra.mxu0 0
    %1188 = vmatprep.subr.bf16.mxu0 0
    %1189 = vmatpush1.bf16.msra.mxu0 0
    %1190 = vmatprep.subr.bf16.mxu0 0
    %1191 = vmatpush1.bf16.msra.mxu0 0
    %1192 = vmatprep.subr.bf16.mxu0 0
    %1193 = vmatpush1.bf16.msra.mxu0 0
    %1194 = vmatprep.subr.bf16.mxu0 0
    %1195 = vmatpush1.bf16.msra.mxu0 0
    %1196 = vmatprep.subr.bf16.mxu0 0
    %1197 = vmatpush1.bf16.msra.mxu0 0
    %1198 = vmatprep.mubr.bf16.mxu0 0
    %1199 = vmatmul.mubr.bf16.gmra.mrb[0].mxu0 %v947
    %v1200 = vpop.f32.mrb[0].mxu0
    %v1201 = vadd.f32 %v993, %v1200
    %v1202 = vpop.f32.mrb[0].mxu0
    %v1203 = vpop.f32.mrb[0].mxu0
    %v1204 = vpop.f32.mrb[0].mxu0
    %1205 = vdwg.mxu0
    %v1206 = vadd.f32 %v943, %v1160
    %v1207 = vadd.f32 %v944, %v1162
    %v1208 = vxor.u32 %v1206, 2147483648
    %v1209 = vxor.u32 %v1207, 2147483648
    %v1210 = vmul.f32 %v1208, 1.442695
    %v1211 = vpow.pop %v1210
    %v1212 = vmul.f32 %v1209, 1.442695
    %v1213 = vpow.pop %v1212
    %v1214 = vadd.f32 %v1211, 1.0
    %v1215 = vadd.f32 %v1213, 1.0
    %v1216 = vrcp.pop %v1214
    %v1217 = vmul.f32 1.0, %v1216
    %v1218 = vrcp.pop %v1215
    %v1219 = vmul.f32 1.0, %v1218
    %v1220 = vmul.f32 %v1217, %v1201
    %v1221 = vadd.f32 %v945, %v1220
    %v1222 = vtanh.pop %v1221
    %v1223 = vsub.f32 1.0, %v1219
    %v1224 = vmul.f32 %v1223, %v1222
    %v1225 = vmul.f32 %v1219, %v946
    %v1226 = vadd.f32 %v1224, %v1225
    %1227 = vst [vmem:[#allocation2] sm:$0xff] %v1226
    %s1228 = scalar_lea.vmem [#allocation11], 24
    %1229 = vst [vmem:[%s1228] sm:$0xff] %v1226
    %s1230 = scalar_lea.vmem [#allocation3], 96
    %v1231 = vld [vmem:[%s1230] sm:$0xff]
    %v1232 = vld [vmem:[%s1230 + $0x8] sm:$0xff]
    %v1233 = vld [vmem:[%s1230 + $0x10] sm:$0xff]
    %v1234 = vld [vmem:[#allocation2] sm:$0xff]
    %v1235 = vpack.c.bf16 %v1234, %v1234
    %v1236 = vld [vmem:[#allocation8] sm:$0xff]
    %v1237 = vld [vmem:[#allocation8 + $0x8] sm:$0xf]
    %v1238 = vld [vmem:[#allocation8 + $0xc] sm:$0xff]
    %v1239 = vld [vmem:[#allocation8 + $0x14] sm:$0xf]
    %v1240 = vld [vmem:[#allocation8 + $0x18] sm:$0xff]
    %v1241 = vld [vmem:[#allocation8 + $0x20] sm:$0xf]
    %v1242 = vld [vmem:[#allocation8 + $0x24] sm:$0xff]
    %v1243 = vld [vmem:[#allocation8 + $0x2c] sm:$0xf]
    %v1244 = vld [vmem:[#allocation8 + $0x30] sm:$0xff]
    %v1245 = vld [vmem:[#allocation8 + $0x38] sm:$0xf]
    %v1246 = vld [vmem:[#allocation8 + $0x3c] sm:$0xff]
    %v1247 = vld [vmem:[#allocation8 + $0x44] sm:$0xf]
    %v1248 = vld [vmem:[#allocation8 + $0x48] sm:$0xff]
    %v1249 = vld [vmem:[#allocation8 + $0x50] sm:$0xf]
    %v1250 = vld [vmem:[#allocation8 + $0x54] sm:$0xff]
    %v1251 = vld [vmem:[#allocation8 + $0x5c] sm:$0xf]
    %v1252 = vld [vmem:[#allocation8 + $0x60] sm:$0xff]
    %v1253 = vld [vmem:[#allocation8 + $0x68] sm:$0xf]
    %v1254 = vld [vmem:[#allocation8 + $0x6c] sm:$0xff]
    %v1255 = vld [vmem:[#allocation8 + $0x74] sm:$0xf]
    %v1256 = vld [vmem:[#allocation8 + $0x78] sm:$0xff]
    %v1257 = vld [vmem:[#allocation8 + $0x80] sm:$0xf]
    %v1258 = vld [vmem:[#allocation8 + $0x84] sm:$0xff]
    %v1259 = vld [vmem:[#allocation8 + $0x8c] sm:$0xf]
    %v1260 = vld [vmem:[#allocation8 + $0x90] sm:$0xff]
    %v1261 = vld [vmem:[#allocation8 + $0x98] sm:$0xf]
    %v1262 = vld [vmem:[#allocation8 + $0x9c] sm:$0xff]
    %v1263 = vld [vmem:[#allocation8 + $0xa4] sm:$0xf]
    %v1264 = vld [vmem:[#allocation8 + $0xa8] sm:$0xff]
    %v1265 = vld [vmem:[#allocation8 + $0xb0] sm:$0xf]
    %v1266 = vld [vmem:[#allocation8 + $0xb4] sm:$0xff]
    %v1267 = vld [vmem:[#allocation8 + $0xbc] sm:$0xf]
    %v1268 = vld [vmem:[%s4] sm:$0x7]
    %v1270 = vlaneseq
    %v1271 = vshrl.u32 %v1270, 7
    %v1272 = vsub.s32 0, %v1271
    %v1273 = vrot.slane %v1268, %v1272
    %v1274 = vlaneseq
    %v1275 = vshrl.u32 %v1274, 7
    %v1276 = vsub.s32 1, %v1275
    %v1277 = vrot.slane %v1268, %v1276
    %v1278 = vlaneseq
    %v1279 = vshrl.u32 %v1278, 7
    %v1280 = vsub.s32 2, %v1279
    %v1281 = vrot.slane %v1268, %v1280
    %v1317 = vunpack.c.l.b16 %v1236
    %v1318 = vunpack.c.h.b16 %v1236
    %v1319 = vunpack.c.l.b16 %v1237
    %v1320 = vunpack.c.l.b16 %v1238
    %v1321 = vunpack.c.h.b16 %v1238
    %v1322 = vunpack.c.l.b16 %v1239
    %v1323 = vunpack.c.l.b16 %v1240
    %v1324 = vunpack.c.h.b16 %v1240
    %v1325 = vunpack.c.l.b16 %v1241
    %v1326 = vunpack.c.l.b16 %v1242
    %v1327 = vunpack.c.h.b16 %v1242
    %v1328 = vunpack.c.l.b16 %v1243
    %v1329 = vunpack.c.l.b16 %v1244
    %v1330 = vunpack.c.h.b16 %v1244
    %v1331 = vunpack.c.l.b16 %v1245
    %v1332 = vunpack.c.l.b16 %v1246
    %v1333 = vunpack.c.h.b16 %v1246
    %v1334 = vunpack.c.l.b16 %v1247
    %v1335 = vunpack.c.l.b16 %v1248
    %v1336 = vunpack.c.h.b16 %v1248
    %v1337 = vunpack.c.l.b16 %v1249
    %v1338 = vunpack.c.l.b16 %v1250
    %v1339 = vunpack.c.h.b16 %v1250
    %v1340 = vunpack.c.l.b16 %v1251
    %v1341 = vunpack.c.l.b16 %v1252
    %v1342 = vunpack.c.h.b16 %v1252
    %v1343 = vunpack.c.l.b16 %v1253
    %v1344 = vunpack.c.l.b16 %v1254
    %v1345 = vunpack.c.h.b16 %v1254
    %v1346 = vunpack.c.l.b16 %v1255
    %v1347 = vunpack.c.l.b16 %v1256
    %v1348 = vunpack.c.h.b16 %v1256
    %v1349 = vunpack.c.l.b16 %v1257
    %v1350 = vunpack.c.l.b16 %v1258
    %v1351 = vunpack.c.h.b16 %v1258
    %v1352 = vunpack.c.l.b16 %v1259
    %v1353 = vunpack.c.l.b16 %v1260
    %v1354 = vunpack.c.h.b16 %v1260
    %v1355 = vunpack.c.l.b16 %v1261
    %v1356 = vunpack.c.l.b16 %v1262
    %v1357 = vunpack.c.h.b16 %v1262
    %v1358 = vunpack.c.l.b16 %v1263
    %v1359 = vunpack.c.l.b16 %v1264
    %v1360 = vunpack.c.h.b16 %v1264
    %v1361 = vunpack.c.l.b16 %v1265
    %v1362 = vunpack.c.l.b16 %v1266
    %v1363 = vunpack.c.h.b16 %v1266
    %v1364 = vunpack.c.l.b16 %v1267
    %v1365 = vpack.c.b16 %v1320, %v1317
    %v1366 = vpack.c.b16 %v1321, %v1318
    %v1367 = vpack.c.b16 %v1322, %v1319
    %v1368 = vpack.c.b16 %v1326, %v1323
    %v1369 = vpack.c.b16 %v1327, %v1324
    %v1370 = vpack.c.b16 %v1328, %v1325
    %v1371 = vpack.c.b16 %v1332, %v1329
    %v1372 = vpack.c.b16 %v1333, %v1330
    %v1373 = vpack.c.b16 %v1334, %v1331
    %v1374 = vpack.c.b16 %v1338, %v1335
    %v1375 = vpack.c.b16 %v1339, %v1336
    %v1376 = vpack.c.b16 %v1340, %v1337
    %v1377 = vpack.c.b16 %v1344, %v1341
    %v1378 = vpack.c.b16 %v1345, %v1342
    %v1379 = vpack.c.b16 %v1346, %v1343
    %v1380 = vpack.c.b16 %v1350, %v1347
    %v1381 = vpack.c.b16 %v1351, %v1348
    %v1382 = vpack.c.b16 %v1352, %v1349
    %v1383 = vpack.c.b16 %v1356, %v1353
    %v1384 = vpack.c.b16 %v1357, %v1354
    %v1385 = vpack.c.b16 %v1358, %v1355
    %v1386 = vpack.c.b16 %v1362, %v1359
    %v1387 = vpack.c.b16 %v1363, %v1360
    %v1388 = vpack.c.b16 %v1364, %v1361
    %1413 = vmatprep.subr.bf16.mxu0 %v1366
    %1414 = vmatpush1.bf16.msra.mxu0 %v1365
    %1415 = vmatprep.subr.bf16.mxu0 %v1369
    %1416 = vmatpush1.bf16.msra.mxu0 %v1368
    %1417 = vmatprep.subr.bf16.mxu0 %v1372
    %1418 = vmatpush1.bf16.msra.mxu0 %v1371
    %1419 = vmatprep.subr.bf16.mxu0 %v1375
    %1420 = vmatpush1.bf16.msra.mxu0 %v1374
    %1421 = vmatprep.subr.bf16.mxu0 %v1378
    %1422 = vmatpush1.bf16.msra.mxu0 %v1377
    %1423 = vmatprep.subr.bf16.mxu0 %v1381
    %1424 = vmatpush1.bf16.msra.mxu0 %v1380
    %1425 = vmatprep.subr.bf16.mxu0 %v1384
    %1426 = vmatpush1.bf16.msra.mxu0 %v1383
    %1427 = vmatprep.subr.bf16.mxu0 %v1387
    %1428 = vmatpush1.bf16.msra.mxu0 %v1386
    %1429 = vmatprep.subr.bf16.mxu0 0
    %1430 = vmatpush1.bf16.msra.mxu0 0
    %1431 = vmatprep.subr.bf16.mxu0 0
    %1432 = vmatpush1.bf16.msra.mxu0 0
    %1433 = vmatprep.subr.bf16.mxu0 0
    %1434 = vmatpush1.bf16.msra.mxu0 0
    %1435 = vmatprep.subr.bf16.mxu0 0
    %1436 = vmatpush1.bf16.msra.mxu0 0
    %1437 = vmatprep.subr.bf16.mxu0 0
    %1438 = vmatpush1.bf16.msra.mxu0 0
    %1439 = vmatprep.subr.bf16.mxu0 0
    %1440 = vmatpush1.bf16.msra.mxu0 0
    %1441 = vmatprep.subr.bf16.mxu0 0
    %1442 = vmatpush1.bf16.msra.mxu0 0
    %1443 = vmatprep.subr.bf16.mxu0 0
    %1444 = vmatpush1.bf16.msra.mxu0 0
    %1445 = vmatprep.mubr.bf16.mxu0 0
    %1446 = vmatmul.mubr.bf16.gmra.mrb[0].mxu0 %v1235
    %v1447 = vpop.f32.mrb[0].mxu0
    %v1448 = vadd.f32 %v1273, %v1447
    %v1449 = vpop.f32.mrb[0].mxu0
    %v1450 = vadd.f32 %v1277, %v1449
    %v1451 = vpop.f32.mrb[0].mxu0
    %v1452 = vpop.f32.mrb[0].mxu0
    %1453 = vdwg.mxu0
    %1454 = vmatprep.subr.bf16.mxu0 0
    %1455 = vmatpush1.bf16.msra.mxu0 %v1367
    %1456 = vmatprep.subr.bf16.mxu0 0
    %1457 = vmatpush1.bf16.msra.mxu0 %v1370
    %1458 = vmatprep.subr.bf16.mxu0 0
    %1459 = vmatpush1.bf16.msra.mxu0 %v1373
    %1460 = vmatprep.subr.bf16.mxu0 0
    %1461 = vmatpush1.bf16.msra.mxu0 %v1376
    %1462 = vmatprep.subr.bf16.mxu0 0
    %1463 = vmatpush1.bf16.msra.mxu0 %v1379
    %1464 = vmatprep.subr.bf16.mxu0 0
    %1465 = vmatpush1.bf16.msra.mxu0 %v1382
    %1466 = vmatprep.subr.bf16.mxu0 0
    %1467 = vmatpush1.bf16.msra.mxu0 %v1385
    %1468 = vmatprep.subr.bf16.mxu0 0
    %1469 = vmatpush1.bf16.msra.mxu0 %v1388
    %1470 = vmatprep.subr.bf16.mxu0 0
    %1471 = vmatpush1.bf16.msra.mxu0 0
    %1472 = vmatprep.subr.bf16.mxu0 0
    %1473 = vmatpush1.bf16.msra.mxu0 0
    %1474 = vmatprep.subr.bf16.mxu0 0
    %1475 = vmatpush1.bf16.msra.mxu0 0
    %1476 = vmatprep.subr.bf16.mxu0 0
    %1477 = vmatpush1.bf16.msra.mxu0 0
    %1478 = vmatprep.subr.bf16.mxu0 0
    %1479 = vmatpush1.bf16.msra.mxu0 0
    %1480 = vmatprep.subr.bf16.mxu0 0
    %1481 = vmatpush1.bf16.msra.mxu0 0
    %1482 = vmatprep.subr.bf16.mxu0 0
    %1483 = vmatpush1.bf16.msra.mxu0 0
    %1484 = vmatprep.subr.bf16.mxu0 0
    %1485 = vmatpush1.bf16.msra.mxu0 0
    %1486 = vmatprep.mubr.bf16.mxu0 0
    %1487 = vmatmul.mubr.bf16.gmra.mrb[0].mxu0 %v1235
    %v1488 = vpop.f32.mrb[0].mxu0
    %v1489 = vadd.f32 %v1281, %v1488
    %v1490 = vpop.f32.mrb[0].mxu0
    %v1491 = vpop.f32.mrb[0].mxu0
    %v1492 = vpop.f32.mrb[0].mxu0
    %1493 = vdwg.mxu0
    %v1494 = vadd.f32 %v1231, %v1448
    %v1495 = vadd.f32 %v1232, %v1450
    %v1496 = vxor.u32 %v1494, 2147483648
    %v1497 = vxor.u32 %v1495, 2147483648
    %v1498 = vmul.f32 %v1496, 1.442695
    %v1499 = vpow.pop %v1498
    %v1500 = vmul.f32 %v1497, 1.442695
    %v1501 = vpow.pop %v1500
    %v1502 = vadd.f32 %v1499, 1.0
    %v1503 = vadd.f32 %v1501, 1.0
    %v1504 = vrcp.pop %v1502
    %v1505 = vmul.f32 1.0, %v1504
    %v1506 = vrcp.pop %v1503
    %v1507 = vmul.f32 1.0, %v1506
    %v1508 = vmul.f32 %v1505, %v1489
    %v1509 = vadd.f32 %v1233, %v1508
    %v1510 = vtanh.pop %v1509
    %v1511 = vsub.f32 1.0, %v1507
    %v1512 = vmul.f32 %v1511, %v1510
    %v1513 = vmul.f32 %v1507, %v1234
    %v1514 = vadd.f32 %v1512, %v1513
    %1515 = vst [vmem:[#allocation2] sm:$0xff] %v1514
    %s1516 = scalar_lea.vmem [#allocation11], 32
    %1517 = vst [vmem:[%s1516] sm:$0xff] %v1514
    %s1518 = scalar_lea.vmem [#allocation3], 120
    %v1519 = vld [vmem:[%s1518] sm:$0xff]
    %v1520 = vld [vmem:[%s1518 + $0x8] sm:$0xff]
    %v1521 = vld [vmem:[%s1518 + $0x10] sm:$0xff]
    %v1522 = vld [vmem:[#allocation2] sm:$0xff]
    %v1523 = vpack.c.bf16 %v1522, %v1522
    %v1524 = vld [vmem:[#allocation8] sm:$0xff]
    %v1525 = vld [vmem:[#allocation8 + $0x8] sm:$0xf]
    %v1526 = vld [vmem:[#allocation8 + $0xc] sm:$0xff]
    %v1527 = vld [vmem:[#allocation8 + $0x14] sm:$0xf]
    %v1528 = vld [vmem:[#allocation8 + $0x18] sm:$0xff]
    %v1529 = vld [vmem:[#allocation8 + $0x20] sm:$0xf]
    %v1530 = vld [vmem:[#allocation8 + $0x24] sm:$0xff]
    %v1531 = vld [vmem:[#allocation8 + $0x2c] sm:$0xf]
    %v1532 = vld [vmem:[#allocation8 + $0x30] sm:$0xff]
    %v1533 = vld [vmem:[#allocation8 + $0x38] sm:$0xf]
    %v1534 = vld [vmem:[#allocation8 + $0x3c] sm:$0xff]
    %v1535 = vld [vmem:[#allocation8 + $0x44] sm:$0xf]
    %v1536 = vld [vmem:[#allocation8 + $0x48] sm:$0xff]
    %v1537 = vld [vmem:[#allocation8 + $0x50] sm:$0xf]
    %v1538 = vld [vmem:[#allocation8 + $0x54] sm:$0xff]
    %v1539 = vld [vmem:[#allocation8 + $0x5c] sm:$0xf]
    %v1540 = vld [vmem:[#allocation8 + $0x60] sm:$0xff]
    %v1541 = vld [vmem:[#allocation8 + $0x68] sm:$0xf]
    %v1542 = vld [vmem:[#allocation8 + $0x6c] sm:$0xff]
    %v1543 = vld [vmem:[#allocation8 + $0x74] sm:$0xf]
    %v1544 = vld [vmem:[#allocation8 + $0x78] sm:$0xff]
    %v1545 = vld [vmem:[#allocation8 + $0x80] sm:$0xf]
    %v1546 = vld [vmem:[#allocation8 + $0x84] sm:$0xff]
    %v1547 = vld [vmem:[#allocation8 + $0x8c] sm:$0xf]
    %v1548 = vld [vmem:[#allocation8 + $0x90] sm:$0xff]
    %v1549 = vld [vmem:[#allocation8 + $0x98] sm:$0xf]
    %v1550 = vld [vmem:[#allocation8 + $0x9c] sm:$0xff]
    %v1551 = vld [vmem:[#allocation8 + $0xa4] sm:$0xf]
    %v1552 = vld [vmem:[#allocation8 + $0xa8] sm:$0xff]
    %v1553 = vld [vmem:[#allocation8 + $0xb0] sm:$0xf]
    %v1554 = vld [vmem:[#allocation8 + $0xb4] sm:$0xff]
    %v1555 = vld [vmem:[#allocation8 + $0xbc] sm:$0xf]
    %v1556 = vld [vmem:[%s4] sm:$0x7]
    %v1558 = vlaneseq
    %v1559 = vshrl.u32 %v1558, 7
    %v1560 = vsub.s32 0, %v1559
    %v1561 = vrot.slane %v1556, %v1560
    %v1562 = vlaneseq
    %v1563 = vshrl.u32 %v1562, 7
    %v1564 = vsub.s32 1, %v1563
    %v1565 = vrot.slane %v1556, %v1564
    %v1566 = vlaneseq
    %v1567 = vshrl.u32 %v1566, 7
    %v1568 = vsub.s32 2, %v1567
    %v1569 = vrot.slane %v1556, %v1568
    %v1605 = vunpack.c.l.b16 %v1524
    %v1606 = vunpack.c.h.b16 %v1524
    %v1607 = vunpack.c.l.b16 %v1525
    %v1608 = vunpack.c.l.b16 %v1526
    %v1609 = vunpack.c.h.b16 %v1526
    %v1610 = vunpack.c.l.b16 %v1527
    %v1611 = vunpack.c.l.b16 %v1528
    %v1612 = vunpack.c.h.b16 %v1528
    %v1613 = vunpack.c.l.b16 %v1529
    %v1614 = vunpack.c.l.b16 %v1530
    %v1615 = vunpack.c.h.b16 %v1530
    %v1616 = vunpack.c.l.b16 %v1531
    %v1617 = vunpack.c.l.b16 %v1532
    %v1618 = vunpack.c.h.b16 %v1532
    %v1619 = vunpack.c.l.b16 %v1533
    %v1620 = vunpack.c.l.b16 %v1534
    %v1621 = vunpack.c.h.b16 %v1534
    %v1622 = vunpack.c.l.b16 %v1535
    %v1623 = vunpack.c.l.b16 %v1536
    %v1624 = vunpack.c.h.b16 %v1536
    %v1625 = vunpack.c.l.b16 %v1537
    %v1626 = vunpack.c.l.b16 %v1538
    %v1627 = vunpack.c.h.b16 %v1538
    %v1628 = vunpack.c.l.b16 %v1539
    %v1629 = vunpack.c.l.b16 %v1540
    %v1630 = vunpack.c.h.b16 %v1540
    %v1631 = vunpack.c.l.b16 %v1541
    %v1632 = vunpack.c.l.b16 %v1542
    %v1633 = vunpack.c.h.b16 %v1542
    %v1634 = vunpack.c.l.b16 %v1543
    %v1635 = vunpack.c.l.b16 %v1544
    %v1636 = vunpack.c.h.b16 %v1544
    %v1637 = vunpack.c.l.b16 %v1545
    %v1638 = vunpack.c.l.b16 %v1546
    %v1639 = vunpack.c.h.b16 %v1546
    %v1640 = vunpack.c.l.b16 %v1547
    %v1641 = vunpack.c.l.b16 %v1548
    %v1642 = vunpack.c.h.b16 %v1548
    %v1643 = vunpack.c.l.b16 %v1549
    %v1644 = vunpack.c.l.b16 %v1550
    %v1645 = vunpack.c.h.b16 %v1550
    %v1646 = vunpack.c.l.b16 %v1551
    %v1647 = vunpack.c.l.b16 %v1552
    %v1648 = vunpack.c.h.b16 %v1552
    %v1649 = vunpack.c.l.b16 %v1553
    %v1650 = vunpack.c.l.b16 %v1554
    %v1651 = vunpack.c.h.b16 %v1554
    %v1652 = vunpack.c.l.b16 %v1555
    %v1653 = vpack.c.b16 %v1608, %v1605
    %v1654 = vpack.c.b16 %v1609, %v1606
    %v1655 = vpack.c.b16 %v1610, %v1607
    %v1656 = vpack.c.b16 %v1614, %v1611
    %v1657 = vpack.c.b16 %v1615, %v1612
    %v1658 = vpack.c.b16 %v1616, %v1613
    %v1659 = vpack.c.b16 %v1620, %v1617
    %v1660 = vpack.c.b16 %v1621, %v1618
    %v1661 = vpack.c.b16 %v1622, %v1619
    %v1662 = vpack.c.b16 %v1626, %v1623
    %v1663 = vpack.c.b16 %v1627, %v1624
    %v1664 = vpack.c.b16 %v1628, %v1625
    %v1665 = vpack.c.b16 %v1632, %v1629
    %v1666 = vpack.c.b16 %v1633, %v1630
    %v1667 = vpack.c.b16 %v1634, %v1631
    %v1668 = vpack.c.b16 %v1638, %v1635
    %v1669 = vpack.c.b16 %v1639, %v1636
    %v1670 = vpack.c.b16 %v1640, %v1637
    %v1671 = vpack.c.b16 %v1644, %v1641
    %v1672 = vpack.c.b16 %v1645, %v1642
    %v1673 = vpack.c.b16 %v1646, %v1643
    %v1674 = vpack.c.b16 %v1650, %v1647
    %v1675 = vpack.c.b16 %v1651, %v1648
    %v1676 = vpack.c.b16 %v1652, %v1649
    %1701 = vmatprep.subr.bf16.mxu0 %v1654
    %1702 = vmatpush1.bf16.msra.mxu0 %v1653
    %1703 = vmatprep.subr.bf16.mxu0 %v1657
    %1704 = vmatpush1.bf16.msra.mxu0 %v1656
    %1705 = vmatprep.subr.bf16.mxu0 %v1660
    %1706 = vmatpush1.bf16.msra.mxu0 %v1659
    %1707 = vmatprep.subr.bf16.mxu0 %v1663
    %1708 = vmatpush1.bf16.msra.mxu0 %v1662
    %1709 = vmatprep.subr.bf16.mxu0 %v1666
    %1710 = vmatpush1.bf16.msra.mxu0 %v1665
    %1711 = vmatprep.subr.bf16.mxu0 %v1669
    %1712 = vmatpush1.bf16.msra.mxu0 %v1668
    %1713 = vmatprep.subr.bf16.mxu0 %v1672
    %1714 = vmatpush1.bf16.msra.mxu0 %v1671
    %1715 = vmatprep.subr.bf16.mxu0 %v1675
    %1716 = vmatpush1.bf16.msra.mxu0 %v1674
    %1717 = vmatprep.subr.bf16.mxu0 0
    %1718 = vmatpush1.bf16.msra.mxu0 0
    %1719 = vmatprep.subr.bf16.mxu0 0
    %1720 = vmatpush1.bf16.msra.mxu0 0
    %1721 = vmatprep.subr.bf16.mxu0 0
    %1722 = vmatpush1.bf16.msra.mxu0 0
    %1723 = vmatprep.subr.bf16.mxu0 0
    %1724 = vmatpush1.bf16.msra.mxu0 0
    %1725 = vmatprep.subr.bf16.mxu0 0
    %1726 = vmatpush1.bf16.msra.mxu0 0
    %1727 = vmatprep.subr.bf16.mxu0 0
    %1728 = vmatpush1.bf16.msra.mxu0 0
    %1729 = vmatprep.subr.bf16.mxu0 0
    %1730 = vmatpush1.bf16.msra.mxu0 0
    %1731 = vmatprep.subr.bf16.mxu0 0
    %1732 = vmatpush1.bf16.msra.mxu0 0
    %1733 = vmatprep.mubr.bf16.mxu0 0
    %1734 = vmatmul.mubr.bf16.gmra.mrb[0].mxu0 %v1523
    %v1735 = vpop.f32.mrb[0].mxu0
    %v1736 = vadd.f32 %v1561, %v1735
    %v1737 = vpop.f32.mrb[0].mxu0
    %v1738 = vadd.f32 %v1565, %v1737
    %v1739 = vpop.f32.mrb[0].mxu0
    %v1740 = vpop.f32.mrb[0].mxu0
    %1741 = vdwg.mxu0
    %1742 = vmatprep.subr.bf16.mxu0 0
    %1743 = vmatpush1.bf16.msra.mxu0 %v1655
    %1744 = vmatprep.subr.bf16.mxu0 0
    %1745 = vmatpush1.bf16.msra.mxu0 %v1658
    %1746 = vmatprep.subr.bf16.mxu0 0
    %1747 = vmatpush1.bf16.msra.mxu0 %v1661
    %1748 = vmatprep.subr.bf16.mxu0 0
    %1749 = vmatpush1.bf16.msra.mxu0 %v1664
    %1750 = vmatprep.subr.bf16.mxu0 0
    %1751 = vmatpush1.bf16.msra.mxu0 %v1667
    %1752 = vmatprep.subr.bf16.mxu0 0
    %1753 = vmatpush1.bf16.msra.mxu0 %v1670
    %1754 = vmatprep.subr.bf16.mxu0 0
    %1755 = vmatpush1.bf16.msra.mxu0 %v1673
    %1756 = vmatprep.subr.bf16.mxu0 0
    %1757 = vmatpush1.bf16.msra.mxu0 %v1676
    %1758 = vmatprep.subr.bf16.mxu0 0
    %1759 = vmatpush1.bf16.msra.mxu0 0
    %1760 = vmatprep.subr.bf16.mxu0 0
    %1761 = vmatpush1.bf16.msra.mxu0 0
    %1762 = vmatprep.subr.bf16.mxu0 0
    %1763 = vmatpush1.bf16.msra.mxu0 0
    %1764 = vmatprep.subr.bf16.mxu0 0
    %1765 = vmatpush1.bf16.msra.mxu0 0
    %1766 = vmatprep.subr.bf16.mxu0 0
    %1767 = vmatpush1.bf16.msra.mxu0 0
    %1768 = vmatprep.subr.bf16.mxu0 0
    %1769 = vmatpush1.bf16.msra.mxu0 0
    %1770 = vmatprep.subr.bf16.mxu0 0
    %1771 = vmatpush1.bf16.msra.mxu0 0
    %1772 = vmatprep.subr.bf16.mxu0 0
    %1773 = vmatpush1.bf16.msra.mxu0 0
    %1774 = vmatprep.mubr.bf16.mxu0 0
    %1775 = vmatmul.mubr.bf16.gmra.mrb[0].mxu0 %v1523
    %v1776 = vpop.f32.mrb[0].mxu0
    %v1777 = vadd.f32 %v1569, %v1776
    %v1778 = vpop.f32.mrb[0].mxu0
    %v1779 = vpop.f32.mrb[0].mxu0
    %v1780 = vpop.f32.mrb[0].mxu0
    %1781 = vdwg.mxu0
    %v1782 = vadd.f32 %v1519, %v1736
    %v1783 = vadd.f32 %v1520, %v1738
    %v1784 = vxor.u32 %v1782, 2147483648
    %v1785 = vxor.u32 %v1783, 2147483648
    %v1786 = vmul.f32 %v1784, 1.442695
    %v1787 = vpow.pop %v1786
    %v1788 = vmul.f32 %v1785, 1.442695
    %v1789 = vpow.pop %v1788
    %v1790 = vadd.f32 %v1787, 1.0
    %v1791 = vadd.f32 %v1789, 1.0
    %v1792 = vrcp.pop %v1790
    %v1793 = vmul.f32 1.0, %v1792
    %v1794 = vrcp.pop %v1791
    %v1795 = vmul.f32 1.0, %v1794
    %v1796 = vmul.f32 %v1793, %v1777
    %v1797 = vadd.f32 %v1521, %v1796
    %v1798 = vtanh.pop %v1797
    %v1799 = vsub.f32 1.0, %v1795
    %v1800 = vmul.f32 %v1799, %v1798
    %v1801 = vmul.f32 %v1795, %v1522
    %v1802 = vadd.f32 %v1800, %v1801
    %1803 = vst [vmem:[#allocation2] sm:$0xff] %v1802
    %s1804 = scalar_lea.vmem [#allocation11], 40
    %1805 = vst [vmem:[%s1804] sm:$0xff] %v1802
    %s1806 = scalar_lea.vmem [#allocation3], 144
    %v1807 = vld [vmem:[%s1806] sm:$0xff]
    %v1808 = vld [vmem:[%s1806 + $0x8] sm:$0xff]
    %v1809 = vld [vmem:[%s1806 + $0x10] sm:$0xff]
    %v1810 = vld [vmem:[#allocation2] sm:$0xff]
    %v1811 = vpack.c.bf16 %v1810, %v1810
    %v1812 = vld [vmem:[#allocation8] sm:$0xff]
    %v1813 = vld [vmem:[#allocation8 + $0x8] sm:$0xf]
    %v1814 = vld [vmem:[#allocation8 + $0xc] sm:$0xff]
    %v1815 = vld [vmem:[#allocation8 + $0x14] sm:$0xf]
    %v1816 = vld [vmem:[#allocation8 + $0x18] sm:$0xff]
    %v1817 = vld [vmem:[#allocation8 + $0x20] sm:$0xf]
    %v1818 = vld [vmem:[#allocation8 + $0x24] sm:$0xff]
    %v1819 = vld [vmem:[#allocation8 + $0x2c] sm:$0xf]
    %v1820 = vld [vmem:[#allocation8 + $0x30] sm:$0xff]
    %v1821 = vld [vmem:[#allocation8 + $0x38] sm:$0xf]
    %v1822 = vld [vmem:[#allocation8 + $0x3c] sm:$0xff]
    %v1823 = vld [vmem:[#allocation8 + $0x44] sm:$0xf]
    %v1824 = vld [vmem:[#allocation8 + $0x48] sm:$0xff]
    %v1825 = vld [vmem:[#allocation8 + $0x50] sm:$0xf]
    %v1826 = vld [vmem:[#allocation8 + $0x54] sm:$0xff]
    %v1827 = vld [vmem:[#allocation8 + $0x5c] sm:$0xf]
    %v1828 = vld [vmem:[#allocation8 + $0x60] sm:$0xff]
    %v1829 = vld [vmem:[#allocation8 + $0x68] sm:$0xf]
    %v1830 = vld [vmem:[#allocation8 + $0x6c] sm:$0xff]
    %v1831 = vld [vmem:[#allocation8 + $0x74] sm:$0xf]
    %v1832 = vld [vmem:[#allocation8 + $0x78] sm:$0xff]
    %v1833 = vld [vmem:[#allocation8 + $0x80] sm:$0xf]
    %v1834 = vld [vmem:[#allocation8 + $0x84] sm:$0xff]
    %v1835 = vld [vmem:[#allocation8 + $0x8c] sm:$0xf]
    %v1836 = vld [vmem:[#allocation8 + $0x90] sm:$0xff]
    %v1837 = vld [vmem:[#allocation8 + $0x98] sm:$0xf]
    %v1838 = vld [vmem:[#allocation8 + $0x9c] sm:$0xff]
    %v1839 = vld [vmem:[#allocation8 + $0xa4] sm:$0xf]
    %v1840 = vld [vmem:[#allocation8 + $0xa8] sm:$0xff]
    %v1841 = vld [vmem:[#allocation8 + $0xb0] sm:$0xf]
    %v1842 = vld [vmem:[#allocation8 + $0xb4] sm:$0xff]
    %v1843 = vld [vmem:[#allocation8 + $0xbc] sm:$0xf]
    %v1844 = vld [vmem:[%s4] sm:$0x7]
    %v1846 = vlaneseq
    %v1847 = vshrl.u32 %v1846, 7
    %v1848 = vsub.s32 0, %v1847
    %v1849 = vrot.slane %v1844, %v1848
    %v1850 = vlaneseq
    %v1851 = vshrl.u32 %v1850, 7
    %v1852 = vsub.s32 1, %v1851
    %v1853 = vrot.slane %v1844, %v1852
    %v1854 = vlaneseq
    %v1855 = vshrl.u32 %v1854, 7
    %v1856 = vsub.s32 2, %v1855
    %v1857 = vrot.slane %v1844, %v1856
    %v1893 = vunpack.c.l.b16 %v1812
    %v1894 = vunpack.c.h.b16 %v1812
    %v1895 = vunpack.c.l.b16 %v1813
    %v1896 = vunpack.c.l.b16 %v1814
    %v1897 = vunpack.c.h.b16 %v1814
    %v1898 = vunpack.c.l.b16 %v1815
    %v1899 = vunpack.c.l.b16 %v1816
    %v1900 = vunpack.c.h.b16 %v1816
    %v1901 = vunpack.c.l.b16 %v1817
    %v1902 = vunpack.c.l.b16 %v1818
    %v1903 = vunpack.c.h.b16 %v1818
    %v1904 = vunpack.c.l.b16 %v1819
    %v1905 = vunpack.c.l.b16 %v1820
    %v1906 = vunpack.c.h.b16 %v1820
    %v1907 = vunpack.c.l.b16 %v1821
    %v1908 = vunpack.c.l.b16 %v1822
    %v1909 = vunpack.c.h.b16 %v1822
    %v1910 = vunpack.c.l.b16 %v1823
    %v1911 = vunpack.c.l.b16 %v1824
    %v1912 = vunpack.c.h.b16 %v1824
    %v1913 = vunpack.c.l.b16 %v1825
    %v1914 = vunpack.c.l.b16 %v1826
    %v1915 = vunpack.c.h.b16 %v1826
    %v1916 = vunpack.c.l.b16 %v1827
    %v1917 = vunpack.c.l.b16 %v1828
    %v1918 = vunpack.c.h.b16 %v1828
    %v1919 = vunpack.c.l.b16 %v1829
    %v1920 = vunpack.c.l.b16 %v1830
    %v1921 = vunpack.c.h.b16 %v1830
    %v1922 = vunpack.c.l.b16 %v1831
    %v1923 = vunpack.c.l.b16 %v1832
    %v1924 = vunpack.c.h.b16 %v1832
    %v1925 = vunpack.c.l.b16 %v1833
    %v1926 = vunpack.c.l.b16 %v1834
    %v1927 = vunpack.c.h.b16 %v1834
    %v1928 = vunpack.c.l.b16 %v1835
    %v1929 = vunpack.c.l.b16 %v1836
    %v1930 = vunpack.c.h.b16 %v1836
    %v1931 = vunpack.c.l.b16 %v1837
    %v1932 = vunpack.c.l.b16 %v1838
    %v1933 = vunpack.c.h.b16 %v1838
    %v1934 = vunpack.c.l.b16 %v1839
    %v1935 = vunpack.c.l.b16 %v1840
    %v1936 = vunpack.c.h.b16 %v1840
    %v1937 = vunpack.c.l.b16 %v1841
    %v1938 = vunpack.c.l.b16 %v1842
    %v1939 = vunpack.c.h.b16 %v1842
    %v1940 = vunpack.c.l.b16 %v1843
    %v1941 = vpack.c.b16 %v1896, %v1893
    %v1942 = vpack.c.b16 %v1897, %v1894
    %v1943 = vpack.c.b16 %v1898, %v1895
    %v1944 = vpack.c.b16 %v1902, %v1899
    %v1945 = vpack.c.b16 %v1903, %v1900
    %v1946 = vpack.c.b16 %v1904, %v1901
    %v1947 = vpack.c.b16 %v1908, %v1905
    %v1948 = vpack.c.b16 %v1909, %v1906
    %v1949 = vpack.c.b16 %v1910, %v1907
    %v1950 = vpack.c.b16 %v1914, %v1911
    %v1951 = vpack.c.b16 %v1915, %v1912
    %v1952 = vpack.c.b16 %v1916, %v1913
    %v1953 = vpack.c.b16 %v1920, %v1917
    %v1954 = vpack.c.b16 %v1921, %v1918
    %v1955 = vpack.c.b16 %v1922, %v1919
    %v1956 = vpack.c.b16 %v1926, %v1923
    %v1957 = vpack.c.b16 %v1927, %v1924
    %v1958 = vpack.c.b16 %v1928, %v1925
    %v1959 = vpack.c.b16 %v1932, %v1929
    %v1960 = vpack.c.b16 %v1933, %v1930
    %v1961 = vpack.c.b16 %v1934, %v1931
    %v1962 = vpack.c.b16 %v1938, %v1935
    %v1963 = vpack.c.b16 %v1939, %v1936
    %v1964 = vpack.c.b16 %v1940, %v1937
    %1989 = vmatprep.subr.bf16.mxu0 %v1942
    %1990 = vmatpush1.bf16.msra.mxu0 %v1941
    %1991 = vmatprep.subr.bf16.mxu0 %v1945
    %1992 = vmatpush1.bf16.msra.mxu0 %v1944
    %1993 = vmatprep.subr.bf16.mxu0 %v1948
    %1994 = vmatpush1.bf16.msra.mxu0 %v1947
    %1995 = vmatprep.subr.bf16.mxu0 %v1951
    %1996 = vmatpush1.bf16.msra.mxu0 %v1950
    %1997 = vmatprep.subr.bf16.mxu0 %v1954
    %1998 = vmatpush1.bf16.msra.mxu0 %v1953
    %1999 = vmatprep.subr.bf16.mxu0 %v1957
    %2000 = vmatpush1.bf16.msra.mxu0 %v1956
    %2001 = vmatprep.subr.bf16.mxu0 %v1960
    %2002 = vmatpush1.bf16.msra.mxu0 %v1959
    %2003 = vmatprep.subr.bf16.mxu0 %v1963
    %2004 = vmatpush1.bf16.msra.mxu0 %v1962
    %2005 = vmatprep.subr.bf16.mxu0 0
    %2006 = vmatpush1.bf16.msra.mxu0 0
    %2007 = vmatprep.subr.bf16.mxu0 0
    %2008 = vmatpush1.bf16.msra.mxu0 0
    %2009 = vmatprep.subr.bf16.mxu0 0
    %2010 = vmatpush1.bf16.msra.mxu0 0
    %2011 = vmatprep.subr.bf16.mxu0 0
    %2012 = vmatpush1.bf16.msra.mxu0 0
    %2013 = vmatprep.subr.bf16.mxu0 0
    %2014 = vmatpush1.bf16.msra.mxu0 0
    %2015 = vmatprep.subr.bf16.mxu0 0
    %2016 = vmatpush1.bf16.msra.mxu0 0
    %2017 = vmatprep.subr.bf16.mxu0 0
    %2018 = vmatpush1.bf16.msra.mxu0 0
    %2019 = vmatprep.subr.bf16.mxu0 0
    %2020 = vmatpush1.bf16.msra.mxu0 0
    %2021 = vmatprep.mubr.bf16.mxu0 0
    %2022 = vmatmul.mubr.bf16.gmra.mrb[0].mxu0 %v1811
    %v2023 = vpop.f32.mrb[0].mxu0
    %v2024 = vadd.f32 %v1849, %v2023
    %v2025 = vpop.f32.mrb[0].mxu0
    %v2026 = vadd.f32 %v1853, %v2025
    %v2027 = vpop.f32.mrb[0].mxu0
    %v2028 = vpop.f32.mrb[0].mxu0
    %2029 = vdwg.mxu0
    %2030 = vmatprep.subr.bf16.mxu0 0
    %2031 = vmatpush1.bf16.msra.mxu0 %v1943
    %2032 = vmatprep.subr.bf16.mxu0 0
    %2033 = vmatpush1.bf16.msra.mxu0 %v1946
    %2034 = vmatprep.subr.bf16.mxu0 0
    %2035 = vmatpush1.bf16.msra.mxu0 %v1949
    %2036 = vmatprep.subr.bf16.mxu0 0
    %2037 = vmatpush1.bf16.msra.mxu0 %v1952
    %2038 = vmatprep.subr.bf16.mxu0 0
    %2039 = vmatpush1.bf16.msra.mxu0 %v1955
    %2040 = vmatprep.subr.bf16.mxu0 0
    %2041 = vmatpush1.bf16.msra.mxu0 %v1958
    %2042 = vmatprep.subr.bf16.mxu0 0
    %2043 = vmatpush1.bf16.msra.mxu0 %v1961
    %2044 = vmatprep.subr.bf16.mxu0 0
    %2045 = vmatpush1.bf16.msra.mxu0 %v1964
    %2046 = vmatprep.subr.bf16.mxu0 0
    %2047 = vmatpush1.bf16.msra.mxu0 0
    %2048 = vmatprep.subr.bf16.mxu0 0
    %2049 = vmatpush1.bf16.msra.mxu0 0
    %2050 = vmatprep.subr.bf16.mxu0 0
    %2051 = vmatpush1.bf16.msra.mxu0 0
    %2052 = vmatprep.subr.bf16.mxu0 0
    %2053 = vmatpush1.bf16.msra.mxu0 0
    %2054 = vmatprep.subr.bf16.mxu0 0
    %2055 = vmatpush1.bf16.msra.mxu0 0
    %2056 = vmatprep.subr.bf16.mxu0 0
    %2057 = vmatpush1.bf16.msra.mxu0 0
    %2058 = vmatprep.subr.bf16.mxu0 0
    %2059 = vmatpush1.bf16.msra.mxu0 0
    %2060 = vmatprep.subr.bf16.mxu0 0
    %2061 = vmatpush1.bf16.msra.mxu0 0
    %2062 = vmatprep.mubr.bf16.mxu0 0
    %2063 = vmatmul.mubr.bf16.gmra.mrb[0].mxu0 %v1811
    %v2064 = vpop.f32.mrb[0].mxu0
    %v2065 = vadd.f32 %v1857, %v2064
    %v2066 = vpop.f32.mrb[0].mxu0
    %v2067 = vpop.f32.mrb[0].mxu0
    %v2068 = vpop.f32.mrb[0].mxu0
    %2069 = vdwg.mxu0
    %v2070 = vadd.f32 %v1807, %v2024
    %v2071 = vadd.f32 %v1808, %v2026
    %v2072 = vxor.u32 %v2070, 2147483648
    %v2073 = vxor.u32 %v2071, 2147483648
    %v2074 = vmul.f32 %v2072, 1.442695
    %v2075 = vpow.pop %v2074
    %v2076 = vmul.f32 %v2073, 1.442695
    %v2077 = vpow.pop %v2076
    %v2078 = vadd.f32 %v2075, 1.0
    %v2079 = vadd.f32 %v2077, 1.0
    %v2080 = vrcp.pop %v2078
    %v2081 = vmul.f32 1.0, %v2080
    %v2082 = vrcp.pop %v2079
    %v2083 = vmul.f32 1.0, %v2082
    %v2084 = vmul.f32 %v2081, %v2065
    %v2085 = vadd.f32 %v1809, %v2084
    %v2086 = vtanh.pop %v2085
    %v2087 = vsub.f32 1.0, %v2083
    %v2088 = vmul.f32 %v2087, %v2086
    %v2089 = vmul.f32 %v2083, %v1810
    %v2090 = vadd.f32 %v2088, %v2089
    %2091 = vst [vmem:[#allocation2] sm:$0xff] %v2090
    %s2092 = scalar_lea.vmem [#allocation11], 48
    %2093 = vst [vmem:[%s2092] sm:$0xff] %v2090
    %s2094 = scalar_lea.vmem [#allocation3], 168
    %v2095 = vld [vmem:[%s2094] sm:$0xff]
    %v2096 = vld [vmem:[%s2094 + $0x8] sm:$0xff]
    %v2097 = vld [vmem:[%s2094 + $0x10] sm:$0xff]
    %v2098 = vld [vmem:[#allocation2] sm:$0xff]
    %v2099 = vpack.c.bf16 %v2098, %v2098
    %v2100 = vld [vmem:[#allocation8] sm:$0xff]
    %v2101 = vld [vmem:[#allocation8 + $0x8] sm:$0xf]
    %v2102 = vld [vmem:[#allocation8 + $0xc] sm:$0xff]
    %v2103 = vld [vmem:[#allocation8 + $0x14] sm:$0xf]
    %v2104 = vld [vmem:[#allocation8 + $0x18] sm:$0xff]
    %v2105 = vld [vmem:[#allocation8 + $0x20] sm:$0xf]
    %v2106 = vld [vmem:[#allocation8 + $0x24] sm:$0xff]
    %v2107 = vld [vmem:[#allocation8 + $0x2c] sm:$0xf]
    %v2108 = vld [vmem:[#allocation8 + $0x30] sm:$0xff]
    %v2109 = vld [vmem:[#allocation8 + $0x38] sm:$0xf]
    %v2110 = vld [vmem:[#allocation8 + $0x3c] sm:$0xff]
    %v2111 = vld [vmem:[#allocation8 + $0x44] sm:$0xf]
    %v2112 = vld [vmem:[#allocation8 + $0x48] sm:$0xff]
    %v2113 = vld [vmem:[#allocation8 + $0x50] sm:$0xf]
    %v2114 = vld [vmem:[#allocation8 + $0x54] sm:$0xff]
    %v2115 = vld [vmem:[#allocation8 + $0x5c] sm:$0xf]
    %v2116 = vld [vmem:[#allocation8 + $0x60] sm:$0xff]
    %v2117 = vld [vmem:[#allocation8 + $0x68] sm:$0xf]
    %v2118 = vld [vmem:[#allocation8 + $0x6c] sm:$0xff]
    %v2119 = vld [vmem:[#allocation8 + $0x74] sm:$0xf]
    %v2120 = vld [vmem:[#allocation8 + $0x78] sm:$0xff]
    %v2121 = vld [vmem:[#allocation8 + $0x80] sm:$0xf]
    %v2122 = vld [vmem:[#allocation8 + $0x84] sm:$0xff]
    %v2123 = vld [vmem:[#allocation8 + $0x8c] sm:$0xf]
    %v2124 = vld [vmem:[#allocation8 + $0x90] sm:$0xff]
    %v2125 = vld [vmem:[#allocation8 + $0x98] sm:$0xf]
    %v2126 = vld [vmem:[#allocation8 + $0x9c] sm:$0xff]
    %v2127 = vld [vmem:[#allocation8 + $0xa4] sm:$0xf]
    %v2128 = vld [vmem:[#allocation8 + $0xa8] sm:$0xff]
    %v2129 = vld [vmem:[#allocation8 + $0xb0] sm:$0xf]
    %v2130 = vld [vmem:[#allocation8 + $0xb4] sm:$0xff]
    %v2131 = vld [vmem:[#allocation8 + $0xbc] sm:$0xf]
    %v2132 = vld [vmem:[%s4] sm:$0x7]
    %v2134 = vlaneseq
    %v2135 = vshrl.u32 %v2134, 7
    %v2136 = vsub.s32 0, %v2135
    %v2137 = vrot.slane %v2132, %v2136
    %v2138 = vlaneseq
    %v2139 = vshrl.u32 %v2138, 7
    %v2140 = vsub.s32 1, %v2139
    %v2141 = vrot.slane %v2132, %v2140
    %v2142 = vlaneseq
    %v2143 = vshrl.u32 %v2142, 7
    %v2144 = vsub.s32 2, %v2143
    %v2145 = vrot.slane %v2132, %v2144
    %v2181 = vunpack.c.l.b16 %v2100
    %v2182 = vunpack.c.h.b16 %v2100
    %v2183 = vunpack.c.l.b16 %v2101
    %v2184 = vunpack.c.l.b16 %v2102
    %v2185 = vunpack.c.h.b16 %v2102
    %v2186 = vunpack.c.l.b16 %v2103
    %v2187 = vunpack.c.l.b16 %v2104
    %v2188 = vunpack.c.h.b16 %v2104
    %v2189 = vunpack.c.l.b16 %v2105
    %v2190 = vunpack.c.l.b16 %v2106
    %v2191 = vunpack.c.h.b16 %v2106
    %v2192 = vunpack.c.l.b16 %v2107
    %v2193 = vunpack.c.l.b16 %v2108
    %v2194 = vunpack.c.h.b16 %v2108
    %v2195 = vunpack.c.l.b16 %v2109
    %v2196 = vunpack.c.l.b16 %v2110
    %v2197 = vunpack.c.h.b16 %v2110
    %v2198 = vunpack.c.l.b16 %v2111
    %v2199 = vunpack.c.l.b16 %v2112
    %v2200 = vunpack.c.h.b16 %v2112
    %v2201 = vunpack.c.l.b16 %v2113
    %v2202 = vunpack.c.l.b16 %v2114
    %v2203 = vunpack.c.h.b16 %v2114
    %v2204 = vunpack.c.l.b16 %v2115
    %v2205 = vunpack.c.l.b16 %v2116
    %v2206 = vunpack.c.h.b16 %v2116
    %v2207 = vunpack.c.l.b16 %v2117
    %v2208 = vunpack.c.l.b16 %v2118
    %v2209 = vunpack.c.h.b16 %v2118
    %v2210 = vunpack.c.l.b16 %v2119
    %v2211 = vunpack.c.l.b16 %v2120
    %v2212 = vunpack.c.h.b16 %v2120
    %v2213 = vunpack.c.l.b16 %v2121
    %v2214 = vunpack.c.l.b16 %v2122
    %v2215 = vunpack.c.h.b16 %v2122
    %v2216 = vunpack.c.l.b16 %v2123
    %v2217 = vunpack.c.l.b16 %v2124
    %v2218 = vunpack.c.h.b16 %v2124
    %v2219 = vunpack.c.l.b16 %v2125
    %v2220 = vunpack.c.l.b16 %v2126
    %v2221 = vunpack.c.h.b16 %v2126
    %v2222 = vunpack.c.l.b16 %v2127
    %v2223 = vunpack.c.l.b16 %v2128
    %v2224 = vunpack.c.h.b16 %v2128
    %v2225 = vunpack.c.l.b16 %v2129
    %v2226 = vunpack.c.l.b16 %v2130
    %v2227 = vunpack.c.h.b16 %v2130
    %v2228 = vunpack.c.l.b16 %v2131
    %v2229 = vpack.c.b16 %v2184, %v2181
    %v2230 = vpack.c.b16 %v2185, %v2182
    %v2231 = vpack.c.b16 %v2186, %v2183
    %v2232 = vpack.c.b16 %v2190, %v2187
    %v2233 = vpack.c.b16 %v2191, %v2188
    %v2234 = vpack.c.b16 %v2192, %v2189
    %v2235 = vpack.c.b16 %v2196, %v2193
    %v2236 = vpack.c.b16 %v2197, %v2194
    %v2237 = vpack.c.b16 %v2198, %v2195
    %v2238 = vpack.c.b16 %v2202, %v2199
    %v2239 = vpack.c.b16 %v2203, %v2200
    %v2240 = vpack.c.b16 %v2204, %v2201
    %v2241 = vpack.c.b16 %v2208, %v2205
    %v2242 = vpack.c.b16 %v2209, %v2206
    %v2243 = vpack.c.b16 %v2210, %v2207
    %v2244 = vpack.c.b16 %v2214, %v2211
    %v2245 = vpack.c.b16 %v2215, %v2212
    %v2246 = vpack.c.b16 %v2216, %v2213
    %v2247 = vpack.c.b16 %v2220, %v2217
    %v2248 = vpack.c.b16 %v2221, %v2218
    %v2249 = vpack.c.b16 %v2222, %v2219
    %v2250 = vpack.c.b16 %v2226, %v2223
    %v2251 = vpack.c.b16 %v2227, %v2224
    %v2252 = vpack.c.b16 %v2228, %v2225
    %2277 = vmatprep.subr.bf16.mxu0 %v2230
    %2278 = vmatpush1.bf16.msra.mxu0 %v2229
    %2279 = vmatprep.subr.bf16.mxu0 %v2233
    %2280 = vmatpush1.bf16.msra.mxu0 %v2232
    %2281 = vmatprep.subr.bf16.mxu0 %v2236
    %2282 = vmatpush1.bf16.msra.mxu0 %v2235
    %2283 = vmatprep.subr.bf16.mxu0 %v2239
    %2284 = vmatpush1.bf16.msra.mxu0 %v2238
    %2285 = vmatprep.subr.bf16.mxu0 %v2242
    %2286 = vmatpush1.bf16.msra.mxu0 %v2241
    %2287 = vmatprep.subr.bf16.mxu0 %v2245
    %2288 = vmatpush1.bf16.msra.mxu0 %v2244
    %2289 = vmatprep.subr.bf16.mxu0 %v2248
    %2290 = vmatpush1.bf16.msra.mxu0 %v2247
    %2291 = vmatprep.subr.bf16.mxu0 %v2251
    %2292 = vmatpush1.bf16.msra.mxu0 %v2250
    %2293 = vmatprep.subr.bf16.mxu0 0
    %2294 = vmatpush1.bf16.msra.mxu0 0
    %2295 = vmatprep.subr.bf16.mxu0 0
    %2296 = vmatpush1.bf16.msra.mxu0 0
    %2297 = vmatprep.subr.bf16.mxu0 0
    %2298 = vmatpush1.bf16.msra.mxu0 0
    %2299 = vmatprep.subr.bf16.mxu0 0
    %2300 = vmatpush1.bf16.msra.mxu0 0
    %2301 = vmatprep.subr.bf16.mxu0 0
    %2302 = vmatpush1.bf16.msra.mxu0 0
    %2303 = vmatprep.subr.bf16.mxu0 0
    %2304 = vmatpush1.bf16.msra.mxu0 0
    %2305 = vmatprep.subr.bf16.mxu0 0
    %2306 = vmatpush1.bf16.msra.mxu0 0
    %2307 = vmatprep.subr.bf16.mxu0 0
    %2308 = vmatpush1.bf16.msra.mxu0 0
    %2309 = vmatprep.mubr.bf16.mxu0 0
    %2310 = vmatmul.mubr.bf16.gmra.mrb[0].mxu0 %v2099
    %v2311 = vpop.f32.mrb[0].mxu0
    %v2312 = vadd.f32 %v2137, %v2311
    %v2313 = vpop.f32.mrb[0].mxu0
    %v2314 = vadd.f32 %v2141, %v2313
    %v2315 = vpop.f32.mrb[0].mxu0
    %v2316 = vpop.f32.mrb[0].mxu0
    %2317 = vdwg.mxu0
    %2318 = vmatprep.subr.bf16.mxu0 0
    %2319 = vmatpush1.bf16.msra.mxu0 %v2231
    %2320 = vmatprep.subr.bf16.mxu0 0
    %2321 = vmatpush1.bf16.msra.mxu0 %v2234
    %2322 = vmatprep.subr.bf16.mxu0 0
    %2323 = vmatpush1.bf16.msra.mxu0 %v2237
    %2324 = vmatprep.subr.bf16.mxu0 0
    %2325 = vmatpush1.bf16.msra.mxu0 %v2240
    %2326 = vmatprep.subr.bf16.mxu0 0
    %2327 = vmatpush1.bf16.msra.mxu0 %v2243
    %2328 = vmatprep.subr.bf16.mxu0 0
    %2329 = vmatpush1.bf16.msra.mxu0 %v2246
    %2330 = vmatprep.subr.bf16.mxu0 0
    %2331 = vmatpush1.bf16.msra.mxu0 %v2249
    %2332 = vmatprep.subr.bf16.mxu0 0
    %2333 = vmatpush1.bf16.msra.mxu0 %v2252
    %2334 = vmatprep.subr.bf16.mxu0 0
    %2335 = vmatpush1.bf16.msra.mxu0 0
    %2336 = vmatprep.subr.bf16.mxu0 0
    %2337 = vmatpush1.bf16.msra.mxu0 0
    %2338 = vmatprep.subr.bf16.mxu0 0
    %2339 = vmatpush1.bf16.msra.mxu0 0
    %2340 = vmatprep.subr.bf16.mxu0 0
    %2341 = vmatpush1.bf16.msra.mxu0 0
    %2342 = vmatprep.subr.bf16.mxu0 0
    %2343 = vmatpush1.bf16.msra.mxu0 0
    %2344 = vmatprep.subr.bf16.mxu0 0
    %2345 = vmatpush1.bf16.msra.mxu0 0
    %2346 = vmatprep.subr.bf16.mxu0 0
    %2347 = vmatpush1.bf16.msra.mxu0 0
    %2348 = vmatprep.subr.bf16.mxu0 0
    %2349 = vmatpush1.bf16.msra.mxu0 0
    %2350 = vmatprep.mubr.bf16.mxu0 0
    %2351 = vmatmul.mubr.bf16.gmra.mrb[0].mxu0 %v2099
    %v2352 = vpop.f32.mrb[0].mxu0
    %v2353 = vadd.f32 %v2145, %v2352
    %v2354 = vpop.f32.mrb[0].mxu0
    %v2355 = vpop.f32.mrb[0].mxu0
    %v2356 = vpop.f32.mrb[0].mxu0
    %2357 = vdwg.mxu0
    %v2358 = vadd.f32 %v2095, %v2312
    %v2359 = vadd.f32 %v2096, %v2314
    %v2360 = vxor.u32 %v2358, 2147483648
    %v2361 = vxor.u32 %v2359, 2147483648
    %v2362 = vmul.f32 %v2360, 1.442695
    %v2363 = vpow.pop %v2362
    %v2364 = vmul.f32 %v2361, 1.442695
    %v2365 = vpow.pop %v2364
    %v2366 = vadd.f32 %v2363, 1.0
    %v2367 = vadd.f32 %v2365, 1.0
    %v2368 = vrcp.pop %v2366
    %v2369 = vmul.f32 1.0, %v2368
    %v2370 = vrcp.pop %v2367
    %v2371 = vmul.f32 1.0, %v2370
    %v2372 = vmul.f32 %v2369, %v2353
    %v2373 = vadd.f32 %v2097, %v2372
    %v2374 = vtanh.pop %v2373
    %v2375 = vsub.f32 1.0, %v2371
    %v2376 = vmul.f32 %v2375, %v2374
    %v2377 = vmul.f32 %v2371, %v2098
    %v2378 = vadd.f32 %v2376, %v2377
    %2379 = vst [vmem:[#allocation2] sm:$0xff] %v2378
    %s2380 = scalar_lea.vmem [#allocation11], 56
    %2381 = vst [vmem:[%s2380] sm:$0xff] %v2378
    // Predicated region
    $region42: #{tpu_custom_call.1} parent=1 // pred_check
      _
    $region43: #{tpu_custom_call.1} parent=1 // pred_check_branch
      %2383 = sbr.rel (0) target = $region45
    $region44: #{tpu_custom_call.1} parent=1 // pred_region
      %s2385 = ssub.s32 1024, 1024
      %2386 = vsyncadd [#allocation5], %s2385
      %s2387 = sshll.u32 [#allocation11], 4
      %s2388 = int_to_ptr.vmem [resolvable:$true] %s2387
      %2393 = dma.vmem_to_hbm [thread:$0]  %s2388, 1024, %s6, [#allocation5], 128, 128, 8
    $region45: #{tpu_custom_call.1} parent=1 // pred_fallthru
      _
    // Predicated region
    $region46: #{tpu_custom_call.1} parent=1 // pred_check
      _
    $region47: #{tpu_custom_call.1} parent=1 // pred_check_branch
      %2395 = sbr.rel (0) target = $region49
    $region48: #{tpu_custom_call.1} parent=1 // pred_region
      %2396 = dma.done [#allocation5], 1024
    $region49: #{tpu_custom_call.1} parent=1 // pred_fallthru
      _
    %2397 = vsyncpa [#allocation4], 1
    %2398 = vsyncpa [#allocation7], 1
    %2399 = vsyncpa [#allocation10], 1
    %2400 = vsyncpa [#allocation5], 1

</llo_original>
